<compile_context>
chip_gen: v5e
topology: v5e:2x2
jax: 0.10.0
libtpu: 0.0.40
codegen_flags: <defaults>
</compile_context>

<pallas_src>
import jax
import jax.numpy as jnp
import numpy as np
from jax.experimental import pallas as pl
from jax.experimental.pallas import tpu as pltpu

C_OUT = 96           # fixed by the module definition
C_PAD = 128          # lane-dense padded channel count
NEG_SLOPE = 0.1


def _leaky(v):
    return jnp.where(v >= 0, v, NEG_SLOPE * v)


def dec_block_kernel(pm_ref, ph_ref, wA_ref, bA_ref, wB_ref, bB_ref,
                     out_ref, y1pad_ref):
    """One (batch, row-tile) grid step.

    pm_ref   : (1, TH, W, 9*Cin)   convA patch rows [r*TH, r*TH+TH)         (bf16)
    ph_ref   : (1, TH, W, 9*Cin)   next patch block; only its first 2 rows
                                   (the bottom halo) are used               (bf16)
    wA_ref   : (9*Cin, 128)        convA weights, rows ordered (kh, kw, cin)(bf16)
    bA_ref   : (1, 128)            convA bias, zero-padded 96->128          (fp32)
    wB_ref   : (3, 3*128, 128)     convB weights, [kw, (kh, cin), cout]     (bf16)
    bB_ref   : (1, 128)            convB bias                               (fp32)
    out_ref  : (1, TH, 2, W, 256)  2x-upsampled output tile                 (bf16)
    y1pad_ref: (TH+2, W+2, 128)    zero-bordered convA activation scratch   (bf16)
    """
    r = pl.program_id(1)
    last = pl.num_programs(1) - 1
    TH = out_ref.shape[1]
    W = out_ref.shape[3]
    KA = pm_ref.shape[-1]
    C = y1pad_ref.shape[-1]          # 128

    # ---- convA over the TH+2 halo rows: one MXU matmul on hoisted patches --
    # (reshape is a free relabel when W is a multiple of 16 for bf16)
    patchA = jnp.concatenate([pm_ref[0], ph_ref[0, 0:2]], axis=0)   # (TH+2, W, KA)
    patchA = patchA.reshape((TH + 2) * W, KA)
    accA = jnp.dot(patchA, wA_ref[...], preferred_element_type=jnp.float32)
    y1 = _leaky(accA + bA_ref[...])                                  # fp32 epilogue
    y1pad_ref[:, 1:W + 1, :] = y1.reshape(TH + 2, W, C).astype(y1pad_ref.dtype)

    # convB's 'same' zero padding of the activation:
    # column borders always; row borders only at the image top/bottom edges
    # (interior tiles keep real halo rows there).
    zcol = jnp.zeros((TH + 2, 1, C), y1pad_ref.dtype)
    y1pad_ref[:, 0:1, :] = zcol
    y1pad_ref[:, W + 1:W + 2, :] = zcol

    @pl.when(r == 0)
    def _():
        y1pad_ref[0] = jnp.zeros((W + 2, C), y1pad_ref.dtype)

    @pl.when(r == last)
    def _():
        y1pad_ref[TH + 1] = jnp.zeros((W + 2, C), y1pad_ref.dtype)

    # ---- convB: 3 accumulated MXU matmuls grouped by kw (K = 3*128 = 384) --
    acc = None
    for kw in range(3):
        patch_kw = jnp.concatenate(
            [y1pad_ref[kh:kh + TH, kw:kw + W, :] for kh in range(3)],
            axis=-1).reshape(TH * W, 3 * C)
        part = jnp.dot(patch_kw, wB_ref[kw], preferred_element_type=jnp.float32)
        acc = part if acc is None else acc + part
    y2 = _leaky(acc + bB_ref[...]).reshape(TH, W, C).astype(out_ref.dtype)

    # ---- fused 2x nearest upsample: four lane-dense 128-wide slab stores ---
    # Lanes [0:128] and [128:256] of column w both hold y2[h, w, :]; the
    # wrapper's contiguous reshape turns (W, 256) into (2W, 128).  The size-2
    # axis duplicates rows.
    out_ref[0, :, 0, :, 0:C] = y2
    out_ref[0, :, 0, :, C:2 * C] = y2
    out_ref[0, :, 1, :, 0:C] = y2
    out_ref[0, :, 1, :, C:2 * C] = y2


def dec_conv_conv_up_block(x_nchw, wA, bA, wB, bB, *,
                           tile_rows=None, channels_last=False):
    """NCHW in / NCHW out by default (PyTorch semantics).

    channels_last=True returns NHWC bf16 (no slice+transpose pass) for
    consumers that can stay channels-last.
    """
    B, Cin, H, W = x_nchw.shape
    KA = 9 * Cin

    # ---- row-tile size: largest divisor of H that is <= 16 (>= 2 for halo) -
    if tile_rows is None:
        cands = [t for t in range(2, min(H, 16) + 1) if H % t == 0]
        tile_rows = max(cands) if cands else H
    TH = int(tile_rows)
    if H % TH != 0:
        raise ValueError(f"tile_rows={TH} must divide H={H}")
    if TH < 2:
        raise ValueError("tile_rows must be >= 2 (2-row convA halo per tile)")
    n_r = H // TH

    # ---- NCHW -> NHWC bf16, hoisted convA im2col (tap order (kh, kw, cin)) -
    x = jnp.transpose(x_nchw, (0, 2, 3, 1)).astype(jnp.bfloat16)
    xp = jnp.pad(x, ((0, 0), (1, 1), (1, 1), (0, 0)))           # (B, H+2, W+2, Cin)
    patches = jnp.concatenate(
        [xp[:, kh:kh + H, kw:kw + W, :] for kh in range(3) for kw in range(3)],
        axis=-1)                                                 # (B, H, W, 9*Cin)
    # One zero row on top (convB top edge) + TH-1 zero rows at the bottom so
    # the halo block's index_map (r+1) stays in bounds for the last tile.
    patches = jnp.pad(patches, ((0, 0), (1, TH - 1), (0, 0), (0, 0)))
    # patches: (B, H + TH, W, KA); padded row p holds taps for activation row p-1.

    # ---- weights / biases: pad O (and I for convB) 96 -> 128, reorder ------
    wA_p = jnp.pad(wA, ((0, C_PAD - C_OUT), (0, 0), (0, 0), (0, 0)))
    wA_t = jnp.transpose(wA_p, (2, 3, 1, 0)).reshape(KA, C_PAD).astype(jnp.bfloat16)
    wB_p = jnp.pad(wB, ((0, C_PAD - C_OUT), (0, C_PAD - C_OUT), (0, 0), (0, 0)))
    wB_t = jnp.transpose(wB_p, (3, 2, 1, 0)).reshape(3, 3 * C_PAD, C_PAD)
    wB_t = wB_t.astype(jnp.bfloat16)
    bA_p = jnp.pad(bA, (0, C_PAD - C_OUT)).reshape(1, C_PAD).astype(jnp.float32)
    bB_p = jnp.pad(bB, (0, C_PAD - C_OUT)).reshape(1, C_PAD).astype(jnp.float32)

    # ---- VMEM budget (double-buffered blocks + scratch + in-kernel temps) --
    vmem_est = (
        2 * 2 * TH * W * KA * 2                          # main + halo patch blocks
        + 2 * TH * 2 * W * (2 * C_PAD) * 2               # bf16 output block
        + (TH + 2) * (W + 2) * C_PAD * 2                 # y1pad scratch
        + 2 * (KA + 9 * C_PAD + 2) * C_PAD * 2           # weights + biases
        + (TH + 2) * W * (KA * 2 + 2 * C_PAD * 4)        # patchA + accA/y1 temps
        + TH * W * (2 * 3 * C_PAD * 2 + 2 * C_PAD * 4)   # patch_kw + acc/y2 temps
    )
    vmem_limit = int(min(96 * 2**20, max(24 * 2**20, 2 * vmem_est)))

    flops = 2 * B * H * W * C_PAD * (KA + 9 * C_PAD)
    bytes_accessed = int(
        2 * B * (H + TH) * W * KA * 2                    # patches read (main+halo)
        + (KA * C_PAD + 9 * C_PAD * C_PAD + 2 * C_PAD) * 2
        + B * H * 2 * W * 2 * C_PAD * 2)                 # bf16 output

    y = pl.pallas_call(
        dec_block_kernel,
        out_shape=jax.ShapeDtypeStruct((B, H, 2, W, 2 * C_PAD), jnp.bfloat16),
        grid_spec=pltpu.PrefetchScalarGridSpec(
            num_scalar_prefetch=0,
            grid=(B, n_r),
            in_specs=[
                # main patch rows [r*TH, r*TH+TH)
                pl.BlockSpec((1, TH, W, KA), lambda b, r: (b, r, 0, 0)),
                # next block: its first 2 rows are this tile's bottom halo
                pl.BlockSpec((1, TH, W, KA), lambda b, r: (b, r + 1, 0, 0)),
                pl.BlockSpec((KA, C_PAD), lambda b, r: (0, 0)),
                pl.BlockSpec((1, C_PAD), lambda b, r: (0, 0)),
                pl.BlockSpec((3, 3 * C_PAD, C_PAD), lambda b, r: (0, 0, 0)),
                pl.BlockSpec((1, C_PAD), lambda b, r: (0, 0)),
            ],
            out_specs=pl.BlockSpec((1, TH, 2, W, 2 * C_PAD),
                                   lambda b, r: (b, r, 0, 0, 0)),
            scratch_shapes=[pltpu.VMEM((TH + 2, W + 2, C_PAD), jnp.bfloat16)],
        ),
        compiler_params=pltpu.CompilerParams(
            dimension_semantics=("parallel", "parallel"),
            vmem_limit_bytes=vmem_limit),
        cost_estimate=pl.CostEstimate(flops=flops, transcendentals=0,
                                      bytes_accessed=bytes_accessed),
    )(patches, patches, wA_t, bA_p, wB_t, bB_p)

    # (B, H, 2, W, 2*128) -> (B, 2H, 2W, 128): pure contiguous merge/split,
    # then drop the channel padding (all done in bf16).
    up = y.reshape(B, 2 * H, 2 * W, C_PAD)[..., :C_OUT]
    if channels_last:
        return up                                    # NHWC bf16 fast path
    # PyTorch-compatible NCHW: transpose reads bf16; the final convert to the
    # input dtype fuses into the same copy.
    return jnp.transpose(up, (0, 3, 1, 2)).astype(x_nchw.dtype)


def _reference(x, wA, bA, wB, bB):
    """Pure-JAX fp32 NCHW reference reproducing the PyTorch forward."""
    def conv(z, w, b):
        y = jax.lax.conv_general_dilated(
            z, w, window_strides=(1, 1), padding='SAME',
            dimension_numbers=('NCHW', 'OIHW', 'NCHW'))
        return y + b[None, :, None, None]

    y = conv(x, wA, bA)
    y = jnp.where(y >= 0, y, NEG_SLOPE * y)
    y = conv(y, wB, bB)
    y = jnp.where(y >= 0, y, NEG_SLOPE * y)
    return jnp.repeat(jnp.repeat(y, 2, axis=2), 2, axis=3)


if __name__ == "__main__":
    key = jax.random.PRNGKey(0)
    kx, kwa, kba, kwb, kbb = jax.random.split(key, 5)

    B, Cin, H, W = 2, 4, 16, 16
    x = jax.random.normal(kx, (B, Cin, H, W), jnp.float32)

    # deterministic synthetic parameters (PyTorch-style shapes)
    wA = jax.random.normal(kwa, (C_OUT, Cin, 3, 3), jnp.float32) * 0.1
    bA = jax.random.normal(kba, (C_OUT,), jnp.float32) * 0.1
    wB = jax.random.normal(kwb, (C_OUT, C_OUT, 3, 3), jnp.float32) * 0.05
    bB = jax.random.normal(kbb, (C_OUT,), jnp.float32) * 0.1

    # tile_rows=8 -> grid (B, 2): exercises the row-tile halo + both edge paths.
    fwd = jax.jit(lambda a, b, c, d, e:
                  dec_conv_conv_up_block(a, b, c, d, e, tile_rows=8))
    out = jax.block_until_ready(fwd(x, wA, bA, wB, bB))
    assert out.shape == (B, C_OUT, 2 * H, 2 * W), out.shape

    ref = jax.block_until_ready(_reference(x, wA, bA, wB, bB))
    # Tolerance relaxed vs the fp32 reference: MXU operands and the stored
    # output are bf16 (fp32 accumulation); observed error ~1e-2.
    np.testing.assert_allclose(np.asarray(out, dtype=np.float32),
                               np.asarray(ref, dtype=np.float32),
                               rtol=5e-2, atol=5e-2)
    print("KERNEL_OK")
</pallas_src>

<mosaic_0001>
module attributes {stable_mosaic.version = 11 : i64} {
  func.func @dec_block_kernel(%arg0: i32, %arg1: i32, %arg2: memref<1x8x16x36xbf16, #tpu.memory_space<vmem>>, %arg3: memref<1x8x16x36xbf16, #tpu.memory_space<vmem>>, %arg4: memref<36x128xbf16, #tpu.memory_space<vmem>>, %arg5: memref<1x128xf32, #tpu.memory_space<vmem>>, %arg6: memref<3x384x128xbf16, #tpu.memory_space<vmem>>, %arg7: memref<1x128xf32, #tpu.memory_space<vmem>>, %arg8: memref<1x8x2x16x256xbf16, #tpu.memory_space<vmem>>, %arg9: memref<10x18x128xbf16, #tpu.memory_space<vmem>>) attributes {dimension_semantics = [#tpu.dimension_semantics<parallel>, #tpu.dimension_semantics<parallel>], iteration_bounds = array<i64: 2, 2>, scalar_prefetch = 0 : i64, scratch_operands = 1 : i64, tpu.core_type = #tpu.core_type<tc>, window_params = [{transform_indices = @transform_0, window_bounds = array<i64: 1, 8, 16, 36>}, {transform_indices = @transform_1, window_bounds = array<i64: 1, 8, 16, 36>}, {pipeline_mode = #tpu.pipeline_mode<synchronous>, transform_indices = @transform_2, window_bounds = array<i64: 36, 128>}, {pipeline_mode = #tpu.pipeline_mode<synchronous>, transform_indices = @transform_3, window_bounds = array<i64: 1, 128>}, {pipeline_mode = #tpu.pipeline_mode<synchronous>, transform_indices = @transform_4, window_bounds = array<i64: 3, 384, 128>}, {pipeline_mode = #tpu.pipeline_mode<synchronous>, transform_indices = @transform_5, window_bounds = array<i64: 1, 128>}, {transform_indices = @transform_6, window_bounds = array<i64: 1, 8, 2, 16, 256>}]} {
    %c0 = arith.constant 0 : index
    %c0_0 = arith.constant 0 : index
    %c0_1 = arith.constant 0 : index
    %c0_2 = arith.constant 0 : index
    %0 = vector.load %arg2[%c0, %c0_0, %c0_1, %c0_2] : memref<1x8x16x36xbf16, #tpu.memory_space<vmem>>, vector<1x8x16x36xbf16>
    %1 = vector.shape_cast %0 : vector<1x8x16x36xbf16> to vector<8x16x36xbf16>
    %c0_3 = arith.constant 0 : index
    %c0_4 = arith.constant 0 : index
    %c0_5 = arith.constant 0 : index
    %c0_6 = arith.constant 0 : index
    %2 = vector.load %arg3[%c0_3, %c0_4, %c0_5, %c0_6] : memref<1x8x16x36xbf16, #tpu.memory_space<vmem>>, vector<1x2x16x36xbf16>
    %3 = vector.shape_cast %2 : vector<1x2x16x36xbf16> to vector<2x16x36xbf16>
    %4 = tpu.concatenate %1, %3 in 0 : vector<8x16x36xbf16>, vector<2x16x36xbf16> -> vector<10x16x36xbf16>
    %5 = vector.shape_cast %4 : vector<10x16x36xbf16> to vector<160x36xbf16>
    %c0_7 = arith.constant 0 : index
    %c0_8 = arith.constant 0 : index
    %6 = vector.load %arg4[%c0_7, %c0_8] : memref<36x128xbf16, #tpu.memory_space<vmem>>, vector<36x128xbf16>
    %cst = arith.constant dense<0.000000e+00> : vector<160x128xf32>
    %7 = tpu.matmul %5, %6, %cst {dimension_numbers = #tpu.dot_dimension_numbers<[1], [0], [0], [1], [0, 0, 1, 1], [], []>} : vector<160x36xbf16>, vector<36x128xbf16>, vector<160x128xf32> -> vector<160x128xf32>
    %c0_9 = arith.constant 0 : index
    %c0_10 = arith.constant 0 : index
    %8 = vector.load %arg5[%c0_9, %c0_10] : memref<1x128xf32, #tpu.memory_space<vmem>>, vector<1x128xf32>
    %9 = vector.broadcast %8 : vector<1x128xf32> to vector<160x128xf32>
    %10 = arith.addf %7, %9 : vector<160x128xf32>
    %cst_11 = arith.constant 0.000000e+00 : f32
    %11 = vector.broadcast %cst_11 : f32 to vector<160x128xf32>
    %12 = arith.cmpf oge, %10, %11 : vector<160x128xf32>
    %cst_12 = arith.constant 1.000000e-01 : f32
    %13 = vector.broadcast %cst_12 : f32 to vector<160x128xf32>
    %14 = arith.mulf %13, %10 : vector<160x128xf32>
    %15 = arith.select %12, %10, %14 : vector<160x128xi1>, vector<160x128xf32>
    %16 = vector.shape_cast %15 : vector<160x128xf32> to vector<10x16x128xf32>
    %17 = arith.truncf %16 : vector<10x16x128xf32> to vector<10x16x128xbf16>
    %c0_13 = arith.constant 0 : index
    %c1 = arith.constant 1 : index
    %c0_14 = arith.constant 0 : index
    %18 = vector.load %arg9[%c0_13, %c1, %c0_14] : memref<10x18x128xbf16, #tpu.memory_space<vmem>>, vector<10x16x128xbf16>
    tpu.vector_store %arg9[%c0_13, %c1, %c0_14], %17 {strides = array<i32>} : memref<10x18x128xbf16, #tpu.memory_space<vmem>>, vector<10x16x128xbf16>,
    %cst_15 = arith.constant 0.000000e+00 : bf16
    %19 = vector.broadcast %cst_15 : bf16 to vector<10x1x128xbf16>
    %c0_16 = arith.constant 0 : index
    %c0_17 = arith.constant 0 : index
    %c0_18 = arith.constant 0 : index
    %20 = vector.load %arg9[%c0_16, %c0_17, %c0_18] : memref<10x18x128xbf16, #tpu.memory_space<vmem>>, vector<10x1x128xbf16>
    tpu.vector_store %arg9[%c0_16, %c0_17, %c0_18], %19 {strides = array<i32>} : memref<10x18x128xbf16, #tpu.memory_space<vmem>>, vector<10x1x128xbf16>,
    %c0_19 = arith.constant 0 : index
    %c17 = arith.constant 17 : index
    %c0_20 = arith.constant 0 : index
    %21 = vector.load %arg9[%c0_19, %c17, %c0_20] : memref<10x18x128xbf16, #tpu.memory_space<vmem>>, vector<10x1x128xbf16>
    tpu.vector_store %arg9[%c0_19, %c17, %c0_20], %19 {strides = array<i32>} : memref<10x18x128xbf16, #tpu.memory_space<vmem>>, vector<10x1x128xbf16>,
    %c0_i32 = arith.constant 0 : i32
    %22 = arith.cmpi eq, %arg1, %c0_i32 : i32
    %23 = arith.extui %22 : i1 to i32
    %c0_i32_21 = arith.constant 0 : i32
    %24 = arith.cmpi ne, %23, %c0_i32_21 : i32
    scf.if %24 {
      %cst_84 = arith.constant 0.000000e+00 : bf16
      %76 = vector.broadcast %cst_84 : bf16 to vector<18x128xbf16>
      %c0_85 = arith.constant 0 : index
      %c0_86 = arith.constant 0 : index
      %c0_87 = arith.constant 0 : index
      %77 = vector.load %arg9[%c0_85, %c0_86, %c0_87] : memref<10x18x128xbf16, #tpu.memory_space<vmem>>, vector<1x18x128xbf16>
      %78 = vector.shape_cast %77 : vector<1x18x128xbf16> to vector<18x128xbf16>
      %79 = vector.shape_cast %76 : vector<18x128xbf16> to vector<1x18x128xbf16>
      tpu.vector_store %arg9[%c0_85, %c0_86, %c0_87], %79 {strides = array<i32>} : memref<10x18x128xbf16, #tpu.memory_space<vmem>>, vector<1x18x128xbf16>,
    } else {
    }
    %c1_i32 = arith.constant 1 : i32
    %25 = arith.cmpi eq, %arg1, %c1_i32 : i32
    %26 = arith.extui %25 : i1 to i32
    %c0_i32_22 = arith.constant 0 : i32
    %27 = arith.cmpi ne, %26, %c0_i32_22 : i32
    scf.if %27 {
      %cst_84 = arith.constant 0.000000e+00 : bf16
      %76 = vector.broadcast %cst_84 : bf16 to vector<18x128xbf16>
      %c9 = arith.constant 9 : index
      %c0_85 = arith.constant 0 : index
      %c0_86 = arith.constant 0 : index
      %77 = vector.load %arg9[%c9, %c0_85, %c0_86] : memref<10x18x128xbf16, #tpu.memory_space<vmem>>, vector<1x18x128xbf16>
      %78 = vector.shape_cast %77 : vector<1x18x128xbf16> to vector<18x128xbf16>
      %79 = vector.shape_cast %76 : vector<18x128xbf16> to vector<1x18x128xbf16>
      tpu.vector_store %arg9[%c9, %c0_85, %c0_86], %79 {strides = array<i32>} : memref<10x18x128xbf16, #tpu.memory_space<vmem>>, vector<1x18x128xbf16>,
    } else {
    }
    %c0_23 = arith.constant 0 : index
    %c0_24 = arith.constant 0 : index
    %c0_25 = arith.constant 0 : index
    %28 = vector.load %arg9[%c0_23, %c0_24, %c0_25] : memref<10x18x128xbf16, #tpu.memory_space<vmem>>, vector<8x16x128xbf16>
    %c1_26 = arith.constant 1 : index
    %c0_27 = arith.constant 0 : index
    %c0_28 = arith.constant 0 : index
    %29 = vector.load %arg9[%c1_26, %c0_27, %c0_28] : memref<10x18x128xbf16, #tpu.memory_space<vmem>>, vector<8x16x128xbf16>
    %c2 = arith.constant 2 : index
    %c0_29 = arith.constant 0 : index
    %c0_30 = arith.constant 0 : index
    %30 = vector.load %arg9[%c2, %c0_29, %c0_30] : memref<10x18x128xbf16, #tpu.memory_space<vmem>>, vector<8x16x128xbf16>
    %31 = tpu.concatenate %28, %29, %30 in 2 : vector<8x16x128xbf16>, vector<8x16x128xbf16>, vector<8x16x128xbf16> -> vector<8x16x384xbf16>
    %32 = vector.shape_cast %31 : vector<8x16x384xbf16> to vector<128x384xbf16>
    %c0_31 = arith.constant 0 : index
    %c0_32 = arith.constant 0 : index
    %c0_33 = arith.constant 0 : index
    %33 = vector.load %arg6[%c0_31, %c0_32, %c0_33] : memref<3x384x128xbf16, #tpu.memory_space<vmem>>, vector<1x384x128xbf16>
    %34 = vector.shape_cast %33 : vector<1x384x128xbf16> to vector<384x128xbf16>
    %cst_34 = arith.constant dense<0.000000e+00> : vector<128x128xf32>
    %35 = tpu.matmul %32, %34, %cst_34 {dimension_numbers = #tpu.dot_dimension_numbers<[1], [0], [0], [1], [0, 0, 1, 1], [], []>} : vector<128x384xbf16>, vector<384x128xbf16>, vector<128x128xf32> -> vector<128x128xf32>
    %c0_35 = arith.constant 0 : index
    %c1_36 = arith.constant 1 : index
    %c0_37 = arith.constant 0 : index
    %36 = vector.load %arg9[%c0_35, %c1_36, %c0_37] : memref<10x18x128xbf16, #tpu.memory_space<vmem>>, vector<8x16x128xbf16>
    %c1_38 = arith.constant 1 : index
    %c1_39 = arith.constant 1 : index
    %c0_40 = arith.constant 0 : index
    %37 = vector.load %arg9[%c1_38, %c1_39, %c0_40] : memref<10x18x128xbf16, #tpu.memory_space<vmem>>, vector<8x16x128xbf16>
    %c2_41 = arith.constant 2 : index
    %c1_42 = arith.constant 1 : index
    %c0_43 = arith.constant 0 : index
    %38 = vector.load %arg9[%c2_41, %c1_42, %c0_43] : memref<10x18x128xbf16, #tpu.memory_space<vmem>>, vector<8x16x128xbf16>
    %39 = tpu.concatenate %36, %37, %38 in 2 : vector<8x16x128xbf16>, vector<8x16x128xbf16>, vector<8x16x128xbf16> -> vector<8x16x384xbf16>
    %40 = vector.shape_cast %39 : vector<8x16x384xbf16> to vector<128x384xbf16>
    %c1_44 = arith.constant 1 : index
    %c0_45 = arith.constant 0 : index
    %c0_46 = arith.constant 0 : index
    %41 = vector.load %arg6[%c1_44, %c0_45, %c0_46] : memref<3x384x128xbf16, #tpu.memory_space<vmem>>, vector<1x384x128xbf16>
    %42 = vector.shape_cast %41 : vector<1x384x128xbf16> to vector<384x128xbf16>
    %cst_47 = arith.constant dense<0.000000e+00> : vector<128x128xf32>
    %43 = tpu.matmul %40, %42, %cst_47 {dimension_numbers = #tpu.dot_dimension_numbers<[1], [0], [0], [1], [0, 0, 1, 1], [], []>} : vector<128x384xbf16>, vector<384x128xbf16>, vector<128x128xf32> -> vector<128x128xf32>
    %44 = arith.addf %35, %43 : vector<128x128xf32>
    %c0_48 = arith.constant 0 : index
    %c2_49 = arith.constant 2 : index
    %c0_50 = arith.constant 0 : index
    %45 = vector.load %arg9[%c0_48, %c2_49, %c0_50] : memref<10x18x128xbf16, #tpu.memory_space<vmem>>, vector<8x16x128xbf16>
    %c1_51 = arith.constant 1 : index
    %c2_52 = arith.constant 2 : index
    %c0_53 = arith.constant 0 : index
    %46 = vector.load %arg9[%c1_51, %c2_52, %c0_53] : memref<10x18x128xbf16, #tpu.memory_space<vmem>>, vector<8x16x128xbf16>
    %c2_54 = arith.constant 2 : index
    %c2_55 = arith.constant 2 : index
    %c0_56 = arith.constant 0 : index
    %47 = vector.load %arg9[%c2_54, %c2_55, %c0_56] : memref<10x18x128xbf16, #tpu.memory_space<vmem>>, vector<8x16x128xbf16>
    %48 = tpu.concatenate %45, %46, %47 in 2 : vector<8x16x128xbf16>, vector<8x16x128xbf16>, vector<8x16x128xbf16> -> vector<8x16x384xbf16>
    %49 = vector.shape_cast %48 : vector<8x16x384xbf16> to vector<128x384xbf16>
    %c2_57 = arith.constant 2 : index
    %c0_58 = arith.constant 0 : index
    %c0_59 = arith.constant 0 : index
    %50 = vector.load %arg6[%c2_57, %c0_58, %c0_59] : memref<3x384x128xbf16, #tpu.memory_space<vmem>>, vector<1x384x128xbf16>
    %51 = vector.shape_cast %50 : vector<1x384x128xbf16> to vector<384x128xbf16>
    %cst_60 = arith.constant dense<0.000000e+00> : vector<128x128xf32>
    %52 = tpu.matmul %49, %51, %cst_60 {dimension_numbers = #tpu.dot_dimension_numbers<[1], [0], [0], [1], [0, 0, 1, 1], [], []>} : vector<128x384xbf16>, vector<384x128xbf16>, vector<128x128xf32> -> vector<128x128xf32>
    %53 = arith.addf %44, %52 : vector<128x128xf32>
    %c0_61 = arith.constant 0 : index
    %c0_62 = arith.constant 0 : index
    %54 = vector.load %arg7[%c0_61, %c0_62] : memref<1x128xf32, #tpu.memory_space<vmem>>, vector<1x128xf32>
    %55 = vector.broadcast %54 : vector<1x128xf32> to vector<128x128xf32>
    %56 = arith.addf %53, %55 : vector<128x128xf32>
    %cst_63 = arith.constant 0.000000e+00 : f32
    %57 = vector.broadcast %cst_63 : f32 to vector<128x128xf32>
    %58 = arith.cmpf oge, %56, %57 : vector<128x128xf32>
    %cst_64 = arith.constant 1.000000e-01 : f32
    %59 = vector.broadcast %cst_64 : f32 to vector<128x128xf32>
    %60 = arith.mulf %59, %56 : vector<128x128xf32>
    %61 = arith.select %58, %56, %60 : vector<128x128xi1>, vector<128x128xf32>
    %62 = vector.shape_cast %61 : vector<128x128xf32> to vector<8x16x128xf32>
    %63 = arith.truncf %62 : vector<8x16x128xf32> to vector<8x16x128xbf16>
    %c0_65 = arith.constant 0 : index
    %c0_66 = arith.constant 0 : index
    %c0_67 = arith.constant 0 : index
    %c0_68 = arith.constant 0 : index
    %c0_69 = arith.constant 0 : index
    %64 = vector.load %arg8[%c0_65, %c0_66, %c0_67, %c0_68, %c0_69] : memref<1x8x2x16x256xbf16, #tpu.memory_space<vmem>>, vector<1x8x1x16x128xbf16>
    %65 = vector.shape_cast %64 : vector<1x8x1x16x128xbf16> to vector<8x16x128xbf16>
    %66 = vector.shape_cast %63 : vector<8x16x128xbf16> to vector<1x8x1x16x128xbf16>
    tpu.vector_store %arg8[%c0_65, %c0_66, %c0_67, %c0_68, %c0_69], %66 {strides = array<i32>} : memref<1x8x2x16x256xbf16, #tpu.memory_space<vmem>>, vector<1x8x1x16x128xbf16>,
    %c0_70 = arith.constant 0 : index
    %c0_71 = arith.constant 0 : index
    %c0_72 = arith.constant 0 : index
    %c0_73 = arith.constant 0 : index
    %c128 = arith.constant 128 : index
    %67 = vector.load %arg8[%c0_70, %c0_71, %c0_72, %c0_73, %c128] : memref<1x8x2x16x256xbf16, #tpu.memory_space<vmem>>, vector<1x8x1x16x128xbf16>
    %68 = vector.shape_cast %67 : vector<1x8x1x16x128xbf16> to vector<8x16x128xbf16>
    %69 = vector.shape_cast %63 : vector<8x16x128xbf16> to vector<1x8x1x16x128xbf16>
    tpu.vector_store %arg8[%c0_70, %c0_71, %c0_72, %c0_73, %c128], %69 {strides = array<i32>} : memref<1x8x2x16x256xbf16, #tpu.memory_space<vmem>>, vector<1x8x1x16x128xbf16>,
    %c0_74 = arith.constant 0 : index
    %c0_75 = arith.constant 0 : index
    %c1_76 = arith.constant 1 : index
    %c0_77 = arith.constant 0 : index
    %c0_78 = arith.constant 0 : index
    %70 = vector.load %arg8[%c0_74, %c0_75, %c1_76, %c0_77, %c0_78] : memref<1x8x2x16x256xbf16, #tpu.memory_space<vmem>>, vector<1x8x1x16x128xbf16>
    %71 = vector.shape_cast %70 : vector<1x8x1x16x128xbf16> to vector<8x16x128xbf16>
    %72 = vector.shape_cast %63 : vector<8x16x128xbf16> to vector<1x8x1x16x128xbf16>
    tpu.vector_store %arg8[%c0_74, %c0_75, %c1_76, %c0_77, %c0_78], %72 {strides = array<i32>} : memref<1x8x2x16x256xbf16, #tpu.memory_space<vmem>>, vector<1x8x1x16x128xbf16>,
    %c0_79 = arith.constant 0 : index
    %c0_80 = arith.constant 0 : index
    %c1_81 = arith.constant 1 : index
    %c0_82 = arith.constant 0 : index
    %c128_83 = arith.constant 128 : index
    %73 = vector.load %arg8[%c0_79, %c0_80, %c1_81, %c0_82, %c128_83] : memref<1x8x2x16x256xbf16, #tpu.memory_space<vmem>>, vector<1x8x1x16x128xbf16>
    %74 = vector.shape_cast %73 : vector<1x8x1x16x128xbf16> to vector<8x16x128xbf16>
    %75 = vector.shape_cast %63 : vector<8x16x128xbf16> to vector<1x8x1x16x128xbf16>
    tpu.vector_store %arg8[%c0_79, %c0_80, %c1_81, %c0_82, %c128_83], %75 {strides = array<i32>} : memref<1x8x2x16x256xbf16, #tpu.memory_space<vmem>>, vector<1x8x1x16x128xbf16>,
    return
  }
  func.func @transform_0(%arg0: i32, %arg1: i32) -> (i32, i32, i32, i32) {
    %c0_i32 = arith.constant 0 : i32
    %c0_i32_0 = arith.constant 0 : i32
    %c0_i32_1 = arith.constant 0 : i32
    return %arg0, %arg1, %c0_i32, %c0_i32_0 : i32, i32, i32, i32
  }
  func.func @transform_1(%arg0: i32, %arg1: i32) -> (i32, i32, i32, i32) {
    %c1_i32 = arith.constant 1 : i32
    %0 = arith.addi %arg1, %c1_i32 : i32
    %c0_i32 = arith.constant 0 : i32
    %c0_i32_0 = arith.constant 0 : i32
    %c0_i32_1 = arith.constant 0 : i32
    return %arg0, %0, %c0_i32, %c0_i32_0 : i32, i32, i32, i32
  }
  func.func @transform_2(%arg0: i32, %arg1: i32) -> (i32, i32) {
    %c0_i32 = arith.constant 0 : i32
    %c0_i32_0 = arith.constant 0 : i32
    %c0_i32_1 = arith.constant 0 : i32
    return %c0_i32, %c0_i32_0 : i32, i32
  }
  func.func @transform_3(%arg0: i32, %arg1: i32) -> (i32, i32) {
    %c0_i32 = arith.constant 0 : i32
    %c0_i32_0 = arith.constant 0 : i32
    %c0_i32_1 = arith.constant 0 : i32
    return %c0_i32, %c0_i32_0 : i32, i32
  }
  func.func @transform_4(%arg0: i32, %arg1: i32) -> (i32, i32, i32) {
    %c0_i32 = arith.constant 0 : i32
    %c0_i32_0 = arith.constant 0 : i32
    %c0_i32_1 = arith.constant 0 : i32
    %c0_i32_2 = arith.constant 0 : i32
    return %c0_i32, %c0_i32_0, %c0_i32_1 : i32, i32, i32
  }
  func.func @transform_5(%arg0: i32, %arg1: i32) -> (i32, i32) {
    %c0_i32 = arith.constant 0 : i32
    %c0_i32_0 = arith.constant 0 : i32
    %c0_i32_1 = arith.constant 0 : i32
    return %c0_i32, %c0_i32_0 : i32, i32
  }
  func.func @transform_6(%arg0: i32, %arg1: i32) -> (i32, i32, i32, i32, i32) {
    %c0_i32 = arith.constant 0 : i32
    %c0_i32_0 = arith.constant 0 : i32
    %c0_i32_1 = arith.constant 0 : i32
    %c0_i32_2 = arith.constant 0 : i32
    return %arg0, %arg1, %c0_i32, %c0_i32_0, %c0_i32_1 : i32, i32, i32, i32, i32
  }
}

</mosaic_0001>

<llo_original>
// kernel: _lambda_.1
$region0: #{_lambda_.1}
  #allocation0 [shape = 'u32[]', space=smem, size = 0x4, offset = 0x4, fixed_abs, tag = 'smem constant byte address 0x4 - core index']
  #allocation1 [shape = 'u32[72,128]{1,0:T(1,128)}', space=vmem, size = 0x9000, scoped, tag = 'internal scratch']
  #allocation2 [shape = 'bf16[10,18,128]{2,1,0:T(8,128)(2,1)}', space=vmem, size = 0xf000, scoped, tag = 'scratch operand']
  %s0 = inlined_call_operand.vmem [shape: bf16[2,24,16,36], index: 0, kind: input, shape index: {}, may-alias: {0,1}]
  %s1 = inlined_call_operand.vmem [shape: bf16[2,24,16,36], index: 1, kind: input, shape index: {}, may-alias: {0,1}]
  %s2 = inlined_call_operand.vmem [shape: bf16[36,128], index: 2, kind: input, shape index: {}]
  %s3 = inlined_call_operand.vmem [shape: f32[1,128], index: 3, kind: input, shape index: {}]
  %s4 = inlined_call_operand.vmem [shape: bf16[3,384,128], index: 4, kind: input, shape index: {}]
  %s5 = inlined_call_operand.vmem [shape: f32[1,128], index: 5, kind: input, shape index: {}]
  %s6 = inlined_call_operand.vmem [shape: bf16[2,16,2,16,256], index: 6, kind: output, shape index: {}]
  %s7 = sld [smem:[#allocation0]]
  $region65: #{_lambda_.1} parent=0
    _
  %s9 = ssub.s32 1, %s7
  %s10 = scalar_select 0, %s9, %s7
  loop: start=0, step=1, limit=6
  $region2: #{_lambda_.1} parent=0 // loop_pre_header
    _
  $region3: #{_lambda_.1} parent=0 // loop_header
    %s12 = sphi 0, %s16
    %p13 = scmp.ge.s32.totalorder %s12, 6
    %s19 = sphi 0, %s31
    %s20 = sphi 0, %s27
    %s21 = sphi 0, %s19
    %s22 = sphi 0, %s20
    %s23 = sphi 0, %s21
    %s24 = sphi 0, %s22
    %s36 = sphi 0, %s38
    %s39 = sphi 0, %s36
    %s40 = sphi 0, %s39
    %s56 = sphi 0, %s40
    %s66 = sphi 0, %s68
    %s69 = sphi 0, %s66
    %s70 = sphi 0, %s69
    %s86 = sphi 0, %s70
    %s90 = sphi 0, %s90
    %s92 = sphi 0, %s90
    %s93 = sphi 0, %s92
    %s107 = sphi 0, %s93
    %s111 = sphi 0, %s111
    %s113 = sphi 0, %s111
    %s114 = sphi 0, %s113
    %s128 = sphi 0, %s114
    %s132 = sphi 0, %s132
    %s134 = sphi 0, %s132
    %s135 = sphi 0, %s134
    %s149 = sphi 0, %s135
    %s153 = sphi 0, %s153
    %s155 = sphi 0, %s153
    %s156 = sphi 0, %s155
    %s170 = sphi 0, %s156
    %s178 = sphi 0, %s180
    %s181 = sphi 0, %s178
    %s182 = sphi 0, %s181
    %s198 = sphi 0, %s182
  $region4: #{_lambda_.1} parent=0 // loop_header_branch
    %15 = sbr.rel (%p13) target = $region8
  $region5: #{_lambda_.1} parent=0 // loop_body
    %s17 = ssub.s32 %s12, 1
    %s18 = ssub.s32 %s12, 2
    %s25 = sadd.s32 1, %s20
    %p26 = scmp.ge.s32.totalorder %s25, 2
    %s27 = scalar_select %p26, 0, %s25
    %s28 = sadd.s32 1, %s19
    %s29 = scalar_select %p26, %s28, %s19
    %p30 = scmp.ge.s32.totalorder %s29, 2
    %s31 = scalar_select %p30, 0, %s29
    %s32 = ssub.s32 %s19, %s31
    %s33 = ssub.s32 %s20, %s27
    %s34 = sor.u32 %s32, %s33
    %p35 = scmp.eq.s32.totalorder %s34, 0
    %s37 = sadd.s32 %s36, 1
    %s38 = scalar_select %p35, %s36, %s37
    %p41 = pneg %p35
    %p42 = scmp.eq.s32.totalorder %s12, 3
    %p43 = por %p41, %p42
    %p44 = scmp.ne.s32.totalorder %s36, %s39
    %p45 = scmp.eq.s32.totalorder %s12, 0
    %p46 = por %p44, %p45
    %p47 = scmp.ne.s32.totalorder %s36, %s39
    %p48 = scmp.eq.s32.totalorder %s17, 3
    %p49 = por %p47, %p48
    %p50 = scmp.ne.s32.totalorder %s39, %s40
    %p51 = scmp.eq.s32.totalorder %s17, 0
    %p52 = por %p50, %p51
    %p53 = scmp.ne.s32.totalorder %s39, %s40
    %p54 = scmp.eq.s32.totalorder %s18, 3
    %p55 = por %p53, %p54
    %p57 = scmp.ne.s32.totalorder %s40, %s56
    %p58 = scmp.eq.s32.totalorder %s18, 0
    %p59 = por %p57, %p58
    %s60 = sadd.s32 %s20, 1
    %s61 = sadd.s32 %s27, 1
    %s62 = ssub.s32 %s19, %s31
    %s63 = ssub.s32 %s60, %s61
    %s64 = sor.u32 %s62, %s63
    %p65 = scmp.eq.s32.totalorder %s64, 0
    %s67 = sadd.s32 %s66, 1
    %s68 = scalar_select %p65, %s66, %s67
    %p71 = pneg %p65
    %p72 = scmp.eq.s32.totalorder %s12, 3
    %p73 = por %p71, %p72
    %p74 = scmp.ne.s32.totalorder %s66, %s69
    %p75 = scmp.eq.s32.totalorder %s12, 0
    %p76 = por %p74, %p75
    %p77 = scmp.ne.s32.totalorder %s66, %s69
    %p78 = scmp.eq.s32.totalorder %s17, 3
    %p79 = por %p77, %p78
    %p80 = scmp.ne.s32.totalorder %s69, %s70
    %p81 = scmp.eq.s32.totalorder %s17, 0
    %p82 = por %p80, %p81
    %p83 = scmp.ne.s32.totalorder %s69, %s70
    %p84 = scmp.eq.s32.totalorder %s18, 3
    %p85 = por %p83, %p84
    %p87 = scmp.ne.s32.totalorder %s70, %s86
    %p88 = scmp.eq.s32.totalorder %s18, 0
    %p89 = por %p87, %p88
    %s91 = sadd.s32 %s90, 1
    %p94 = scmp.eq.s32.totalorder %s12, 3
    %p95 = scmp.ne.s32.totalorder %s90, %s92
    %p96 = scmp.eq.s32.totalorder %s12, 0
    %p97 = por %p95, %p96
    %p98 = scmp.ne.s32.totalorder %s90, %s92
    %p99 = scmp.eq.s32.totalorder %s17, 3
    %p100 = por %p98, %p99
    %p101 = scmp.ne.s32.totalorder %s92, %s93
    %p102 = scmp.eq.s32.totalorder %s17, 0
    %p103 = por %p101, %p102
    %p104 = scmp.ne.s32.totalorder %s92, %s93
    %p105 = scmp.eq.s32.totalorder %s18, 3
    %p106 = por %p104, %p105
    %p108 = scmp.ne.s32.totalorder %s93, %s107
    %p109 = scmp.eq.s32.totalorder %s18, 0
    %p110 = por %p108, %p109
    %s112 = sadd.s32 %s111, 1
    %p115 = scmp.eq.s32.totalorder %s12, 3
    %p116 = scmp.ne.s32.totalorder %s111, %s113
    %p117 = scmp.eq.s32.totalorder %s12, 0
    %p118 = por %p116, %p117
    %p119 = scmp.ne.s32.totalorder %s111, %s113
    %p120 = scmp.eq.s32.totalorder %s17, 3
    %p121 = por %p119, %p120
    %p122 = scmp.ne.s32.totalorder %s113, %s114
    %p123 = scmp.eq.s32.totalorder %s17, 0
    %p124 = por %p122, %p123
    %p125 = scmp.ne.s32.totalorder %s113, %s114
    %p126 = scmp.eq.s32.totalorder %s18, 3
    %p127 = por %p125, %p126
    %p129 = scmp.ne.s32.totalorder %s114, %s128
    %p130 = scmp.eq.s32.totalorder %s18, 0
    %p131 = por %p129, %p130
    %s133 = sadd.s32 %s132, 1
    %p136 = scmp.eq.s32.totalorder %s12, 3
    %p137 = scmp.ne.s32.totalorder %s132, %s134
    %p138 = scmp.eq.s32.totalorder %s12, 0
    %p139 = por %p137, %p138
    %p140 = scmp.ne.s32.totalorder %s132, %s134
    %p141 = scmp.eq.s32.totalorder %s17, 3
    %p142 = por %p140, %p141
    %p143 = scmp.ne.s32.totalorder %s134, %s135
    %p144 = scmp.eq.s32.totalorder %s17, 0
    %p145 = por %p143, %p144
    %p146 = scmp.ne.s32.totalorder %s134, %s135
    %p147 = scmp.eq.s32.totalorder %s18, 3
    %p148 = por %p146, %p147
    %p150 = scmp.ne.s32.totalorder %s135, %s149
    %p151 = scmp.eq.s32.totalorder %s18, 0
    %p152 = por %p150, %p151
    %s154 = sadd.s32 %s153, 1
    %p157 = scmp.eq.s32.totalorder %s12, 3
    %p158 = scmp.ne.s32.totalorder %s153, %s155
    %p159 = scmp.eq.s32.totalorder %s12, 0
    %p160 = por %p158, %p159
    %p161 = scmp.ne.s32.totalorder %s153, %s155
    %p162 = scmp.eq.s32.totalorder %s17, 3
    %p163 = por %p161, %p162
    %p164 = scmp.ne.s32.totalorder %s155, %s156
    %p165 = scmp.eq.s32.totalorder %s17, 0
    %p166 = por %p164, %p165
    %p167 = scmp.ne.s32.totalorder %s155, %s156
    %p168 = scmp.eq.s32.totalorder %s18, 3
    %p169 = por %p167, %p168
    %p171 = scmp.ne.s32.totalorder %s156, %s170
    %p172 = scmp.eq.s32.totalorder %s18, 0
    %p173 = por %p171, %p172
    %s174 = ssub.s32 %s19, %s31
    %s175 = ssub.s32 %s20, %s27
    %s176 = sor.u32 %s174, %s175
    %p177 = scmp.eq.s32.totalorder %s176, 0
    %s179 = sadd.s32 %s178, 1
    %s180 = scalar_select %p177, %s178, %s179
    %p183 = pneg %p177
    %p184 = scmp.eq.s32.totalorder %s12, 3
    %p185 = por %p183, %p184
    %p186 = scmp.ne.s32.totalorder %s178, %s181
    %p187 = scmp.eq.s32.totalorder %s12, 0
    %p188 = por %p186, %p187
    %p189 = scmp.ne.s32.totalorder %s178, %s181
    %p190 = scmp.eq.s32.totalorder %s17, 3
    %p191 = por %p189, %p190
    %p192 = scmp.ne.s32.totalorder %s181, %s182
    %p193 = scmp.eq.s32.totalorder %s17, 0
    %p194 = por %p192, %p193
    %p195 = scmp.ne.s32.totalorder %s181, %s182
    %p196 = scmp.eq.s32.totalorder %s18, 3
    %p197 = por %p195, %p196
    %p199 = scmp.ne.s32.totalorder %s182, %s198
    %p200 = scmp.eq.s32.totalorder %s18, 0
    %p201 = por %p199, %p200
    %p202 = scmp.le.s32.totalorder 1, %s12
    %p203 = scmp.lt.s32.totalorder %s12, 5
    %p204 = pnand %p202, %p203
    %p205 = pneg %p204
    // Predicated region
    $region9: #{_lambda_.1} parent=5 // pred_check
      _
    $region10: #{_lambda_.1} parent=5 // pred_check_branch
      %207 = sbr.rel (%p204) target = $region12
    $region11: #{_lambda_.1} parent=5 // pred_region
      %s208 = ssub.s32 %s12, 1
      // Predicated region
      $region13: #{_lambda_.1} parent=11 // pred_check
        %p209 = pneg %p103
      $region14: #{_lambda_.1} parent=11 // pred_check_branch
        %211 = sbr.rel (%p209) target = $region16
      $region15: #{_lambda_.1} parent=11 // pred_region
        _
      $region16: #{_lambda_.1} parent=11 // pred_fallthru
        _
      // Predicated region
      $region17: #{_lambda_.1} parent=11 // pred_check
        %p212 = pneg %p124
      $region18: #{_lambda_.1} parent=11 // pred_check_branch
        %214 = sbr.rel (%p212) target = $region20
      $region19: #{_lambda_.1} parent=11 // pred_region
        _
      $region20: #{_lambda_.1} parent=11 // pred_fallthru
        _
      // Predicated region
      $region21: #{_lambda_.1} parent=11 // pred_check
        %p215 = pneg %p145
      $region22: #{_lambda_.1} parent=11 // pred_check_branch
        %217 = sbr.rel (%p215) target = $region24
      $region23: #{_lambda_.1} parent=11 // pred_region
        _
      $region24: #{_lambda_.1} parent=11 // pred_fallthru
        _
      // Predicated region
      $region25: #{_lambda_.1} parent=11 // pred_check
        %p218 = pneg %p166
      $region26: #{_lambda_.1} parent=11 // pred_check_branch
        %220 = sbr.rel (%p218) target = $region28
      $region27: #{_lambda_.1} parent=11 // pred_region
        _
      $region28: #{_lambda_.1} parent=11 // pred_fallthru
        _
    $region12: #{_lambda_.1} parent=5 // pred_fallthru
      _
    %p221 = scmp.lt.s32.totalorder %s12, 4
    // Predicated region
    $region29: #{_lambda_.1} parent=5 // pred_check
      %p222 = pneg %p221
    $region30: #{_lambda_.1} parent=5 // pred_check_branch
      %224 = sbr.rel (%p222) target = $region32
    $region31: #{_lambda_.1} parent=5 // pred_region
      // Predicated region
      $region33: #{_lambda_.1} parent=31 // pred_check
        %p225 = pneg %p46
      $region34: #{_lambda_.1} parent=31 // pred_check_branch
        %227 = sbr.rel (%p225) target = $region36
      $region35: #{_lambda_.1} parent=31 // pred_region
        %s228 = smul.u32 8, %s20
        %p229 = scmp.lt.s32.totalorder %s19, 1
        %s230 = scalar_select %p229, %s19, 1
        %p231 = scmp.lt.s32.totalorder %s228, 23
        %s232 = scalar_select %p231, %s228, 23
        %s233 = smul.addr %s232, 2
        %s234 = smul.addr %s230, 48
        %s235 = sadd.s32 %s233, %s234
        %s236 = smul.addr %s235, 4
        %s237 = scalar_lea.vmem %s0, %s236
        %s238 = smul.u32 8, %s20
      $region36: #{_lambda_.1} parent=31 // pred_fallthru
        _
      // Predicated region
      $region37: #{_lambda_.1} parent=31 // pred_check
        %p239 = pneg %p76
      $region38: #{_lambda_.1} parent=31 // pred_check_branch
        %241 = sbr.rel (%p239) target = $region40
      $region39: #{_lambda_.1} parent=31 // pred_region
        %s242 = sadd.s32 %s20, 1
        %s243 = smul.u32 8, %s242
        %p244 = scmp.lt.s32.totalorder %s19, 1
        %s245 = scalar_select %p244, %s19, 1
        %p246 = scmp.lt.s32.totalorder %s243, 23
        %s247 = scalar_select %p246, %s243, 23
        %s248 = smul.addr %s247, 2
        %s249 = smul.addr %s245, 48
        %s250 = sadd.s32 %s248, %s249
        %s251 = smul.addr %s250, 4
        %s252 = scalar_lea.vmem %s1, %s251
        %s253 = sadd.s32 %s20, 1
        %s254 = smul.u32 8, %s253
      $region40: #{_lambda_.1} parent=31 // pred_fallthru
        _
    $region32: #{_lambda_.1} parent=5 // pred_fallthru
      _
    %p255 = scmp.le.s32.totalorder 1, %s12
    %p256 = scmp.lt.s32.totalorder %s12, 5
    %p257 = pnand %p255, %p256
    %p258 = pneg %p257
    // Predicated region
    $region41: #{_lambda_.1} parent=5 // pred_check
      _
    $region42: #{_lambda_.1} parent=5 // pred_check_branch
      %260 = sbr.rel (%p257) target = $region44
    $region43: #{_lambda_.1} parent=5 // pred_region
      %s261 = ssub.s32 %s12, 1
      %s262 = smul.u32 8, %s22
      %p263 = scmp.lt.s32.totalorder %s21, 1
      %s264 = scalar_select %p263, %s21, 1
      %p265 = scmp.lt.s32.totalorder %s262, 23
      %s266 = scalar_select %p265, %s262, 23
      %s267 = smul.addr %s266, 2
      %s268 = smul.addr %s264, 48
      %s269 = sadd.s32 %s267, %s268
      %s270 = smul.addr %s269, 4
      %s271 = scalar_lea.vmem %s0, %s270
      %p272 = pneg %p52
      %p273 = pneg %p49
      %s274 = sadd.s32 %s22, 1
      %s275 = smul.u32 8, %s274
      %p276 = scmp.lt.s32.totalorder %s21, 1
      %s277 = scalar_select %p276, %s21, 1
      %p278 = scmp.lt.s32.totalorder %s275, 23
      %s279 = scalar_select %p278, %s275, 23
      %s280 = smul.addr %s279, 2
      %s281 = smul.addr %s277, 48
      %s282 = sadd.s32 %s280, %s281
      %s283 = smul.addr %s282, 4
      %s284 = scalar_lea.vmem %s1, %s283
      %p285 = pneg %p82
      %p286 = pneg %p79
      %p287 = pneg %p103
      %p288 = pneg %p100
      %p289 = pneg %p124
      %p290 = pneg %p121
      %p291 = pneg %p145
      %p292 = pneg %p142
      %p293 = pneg %p166
      %p294 = pneg %p163
      %p295 = pneg %p194
      %p296 = pneg %p191
      %s297 = smul.u32 8, %s22
      %p298 = scmp.lt.s32.totalorder %s21, 1
      %s299 = scalar_select %p298, %s21, 1
      %p300 = scmp.lt.s32.totalorder %s297, 15
      %s301 = scalar_select %p300, %s297, 15
      %s302 = smul.addr %s301, 8
      %s303 = smul.addr %s299, 128
      %s304 = sadd.s32 %s302, %s303
      %s305 = smul.addr %s304, 4
      %s306 = scalar_lea.vmem %s6, %s305
      %s307 = smul.u32 8, %s22
      %p308 = scmp.lt.s32.totalorder %s21, 1
      %s309 = scalar_select %p308, %s21, 1
      %p310 = scmp.lt.s32.totalorder %s307, 23
      %s311 = scalar_select %p310, %s307, 23
      %s312 = smul.addr %s311, 2
      %s313 = smul.addr %s309, 48
      %s314 = sadd.s32 %s312, %s313
      %s315 = smul.addr %s314, 4
      %s316 = scalar_lea.vmem %s0, %s315
      %s317 = smul.u32 8, %s22
      %s318 = sadd.s32 %s22, 1
      %s319 = smul.u32 8, %s318
      %p320 = scmp.lt.s32.totalorder %s21, 1
      %s321 = scalar_select %p320, %s21, 1
      %p322 = scmp.lt.s32.totalorder %s319, 23
      %s323 = scalar_select %p322, %s319, 23
      %s324 = smul.addr %s323, 2
      %s325 = smul.addr %s321, 48
      %s326 = sadd.s32 %s324, %s325
      %s327 = smul.addr %s326, 4
      %s328 = scalar_lea.vmem %s1, %s327
      %s329 = sadd.s32 %s22, 1
      %s330 = smul.u32 8, %s329
      %s331 = smul.u32 8, %s22
      %p332 = scmp.lt.s32.totalorder %s21, 1
      %s333 = scalar_select %p332, %s21, 1
      %p334 = scmp.lt.s32.totalorder %s331, 15
      %s335 = scalar_select %p334, %s331, 15
      %s336 = smul.addr %s335, 8
      %s337 = smul.addr %s333, 128
      %s338 = sadd.s32 %s336, %s337
      %s339 = smul.addr %s338, 4
      %s340 = scalar_lea.vmem %s6, %s339
      %s341 = smul.u32 8, %s22
      %v343 = vld [vmem:[%s316] sm:$0xf]
      %v344 = vld [vmem:[%s316 + $0x4] sm:$0xf]
      %v345 = vld [vmem:[%s316 + $0x8] sm:$0xf]
      %v346 = vld [vmem:[%s316 + $0xc] sm:$0xf]
      %v347 = vld [vmem:[%s316 + $0x10] sm:$0xf]
      %v348 = vld [vmem:[%s316 + $0x14] sm:$0xf]
      %v349 = vld [vmem:[%s316 + $0x18] sm:$0xf]
      %v350 = vld [vmem:[%s316 + $0x1c] sm:$0xf]
      %v351 = vld [vmem:[%s316 + $0x20] sm:$0xf]
      %v352 = vld [vmem:[%s316 + $0x24] sm:$0xf]
      %v353 = vld [vmem:[%s316 + $0x28] sm:$0xf]
      %v354 = vld [vmem:[%s316 + $0x2c] sm:$0xf]
      %v355 = vld [vmem:[%s316 + $0x30] sm:$0xf]
      %v356 = vld [vmem:[%s316 + $0x34] sm:$0xf]
      %v357 = vld [vmem:[%s316 + $0x38] sm:$0xf]
      %v358 = vld [vmem:[%s316 + $0x3c] sm:$0xf]
      %v359 = vld [vmem:[%s328] sm:$0xf]
      %v360 = vld [vmem:[%s328 + $0x4] sm:$0xf]
      %v361 = vld [vmem:[%s328 + $0x8] sm:$0xf]
      %v362 = vld [vmem:[%s328 + $0xc] sm:$0xf]
      %v363 = vld [vmem:[%s2] sm:$0xf]
      %v364 = vld [vmem:[%s2 + $0x4] sm:$0xf]
      %v365 = vld [vmem:[%s2 + $0x8] sm:$0xf]
      %v366 = vld [vmem:[%s2 + $0xc] sm:$0xf]
      %v367 = vld [vmem:[%s2 + $0x10] sm:$0x3]
      %v368 = vld [vmem:[%s3] sm:$0x1]
      %v370 = vperm.slane %v368, 0
      %v392 = vunpack.c.l.b16 %v343
      %v393 = vunpack.c.l.b16 %v344
      %v394 = vunpack.c.l.b16 %v345
      %v395 = vunpack.c.l.b16 %v346
      %v396 = vunpack.c.l.b16 %v347
      %v397 = vunpack.c.l.b16 %v348
      %v398 = vunpack.c.l.b16 %v349
      %v399 = vunpack.c.l.b16 %v350
      %v400 = vunpack.c.l.b16 %v351
      %v401 = vunpack.c.l.b16 %v352
      %v402 = vunpack.c.l.b16 %v353
      %v403 = vunpack.c.l.b16 %v354
      %v404 = vunpack.c.l.b16 %v355
      %v405 = vunpack.c.l.b16 %v356
      %v406 = vunpack.c.l.b16 %v357
      %v407 = vunpack.c.l.b16 %v358
      %v408 = vunpack.c.l.b16 %v359
      %v409 = vunpack.c.l.b16 %v360
      %v410 = vunpack.c.l.b16 %v361
      %v411 = vunpack.c.l.b16 %v362
      %v412 = vpack.c.b16 %v393, %v392
      %v413 = vpack.c.b16 %v395, %v394
      %v414 = vpack.c.b16 %v397, %v396
      %v415 = vpack.c.b16 %v399, %v398
      %v416 = vpack.c.b16 %v401, %v400
      %v417 = vpack.c.b16 %v403, %v402
      %v418 = vpack.c.b16 %v405, %v404
      %v419 = vpack.c.b16 %v407, %v406
      %v420 = vpack.c.b16 %v409, %v408
      %v421 = vpack.c.b16 %v411, %v410
      %v427 = vunpack.c.l.b16 %v363
      %v428 = vunpack.c.l.b16 %v364
      %v429 = vunpack.c.l.b16 %v365
      %v430 = vunpack.c.l.b16 %v366
      %v431 = vunpack.c.l.b16 %v367
      %v432 = vpack.c.b16 %v428, %v427
      %v433 = vpack.c.b16 %v430, %v429
      %v434 = vpack.c.b16 %v431, %v431
      %vm437 = vcmask 293888
      %v439 = vsel %vm437, %v412, 0
      %v442 = vsel %vm437, %v413, 0
      %v445 = vsel %vm437, %v414, 0
      %v448 = vsel %vm437, %v415, 0
      %v451 = vsel %vm437, %v416, 0
      %v454 = vsel %vm437, %v417, 0
      %v457 = vsel %vm437, %v418, 0
      %v460 = vsel %vm437, %v419, 0
      %v463 = vsel %vm437, %v420, 0
      %v466 = vsel %vm437, %v421, 0
      %vm468 = vcmask 1041408
      %v470 = vsel %vm468, %v434, 0
      %472 = vmatpush.bf16.msra.mxu0 0
      %473 = vmatpush.bf16.msra.mxu0 0
      %474 = vmatpush.bf16.msra.mxu0 0
      %475 = vmatpush.bf16.msra.mxu0 0
      %476 = vmatpush.bf16.msra.mxu0 0
      %477 = vmatpush.bf16.msra.mxu0 %v470
      %478 = vmatpush.bf16.msra.mxu0 %v433
      %479 = vmatpush.bf16.msra.mxu0 %v432
      %480 = vmatmul.bf16.gmra.mxu0 %v439
      %v481 = vpop.f32.mrf.mxu0
      %v482 = vadd.f32 %v370, %v481
      %v483 = vpop.f32.mrf.mxu0
      %v484 = vadd.f32 %v370, %v483
      %485 = vmatmul.bf16.gmra.mxu0 %v442
      %v486 = vpop.f32.mrf.mxu0
      %v487 = vadd.f32 %v370, %v486
      %v488 = vpop.f32.mrf.mxu0
      %v489 = vadd.f32 %v370, %v488
      %490 = vmatmul.bf16.gmra.mxu0 %v445
      %v491 = vpop.f32.mrf.mxu0
      %v492 = vadd.f32 %v370, %v491
      %v493 = vpop.f32.mrf.mxu0
      %v494 = vadd.f32 %v370, %v493
      %495 = vmatmul.bf16.gmra.mxu0 %v448
      %v496 = vpop.f32.mrf.mxu0
      %v497 = vadd.f32 %v370, %v496
      %v498 = vpop.f32.mrf.mxu0
      %v499 = vadd.f32 %v370, %v498
      %500 = vmatmul.bf16.gmra.mxu0 %v451
      %v501 = vpop.f32.mrf.mxu0
      %v502 = vadd.f32 %v370, %v501
      %v503 = vpop.f32.mrf.mxu0
      %v504 = vadd.f32 %v370, %v503
      %505 = vmatmul.bf16.gmra.mxu0 %v454
      %v506 = vpop.f32.mrf.mxu0
      %v507 = vadd.f32 %v370, %v506
      %v508 = vpop.f32.mrf.mxu0
      %v509 = vadd.f32 %v370, %v508
      %510 = vmatmul.bf16.gmra.mxu0 %v457
      %v511 = vpop.f32.mrf.mxu0
      %v512 = vadd.f32 %v370, %v511
      %v513 = vpop.f32.mrf.mxu0
      %v514 = vadd.f32 %v370, %v513
      %515 = vmatmul.bf16.gmra.mxu0 %v460
      %v516 = vpop.f32.mrf.mxu0
      %v517 = vadd.f32 %v370, %v516
      %v518 = vpop.f32.mrf.mxu0
      %v519 = vadd.f32 %v370, %v518
      %520 = vmatmul.bf16.gmra.mxu0 %v463
      %v521 = vpop.f32.mrf.mxu0
      %v522 = vadd.f32 %v370, %v521
      %v523 = vpop.f32.mrf.mxu0
      %v524 = vadd.f32 %v370, %v523
      %525 = vmatmul.bf16.gmra.mxu0 %v466
      %v526 = vpop.f32.mrf.mxu0
      %v527 = vadd.f32 %v370, %v526
      %v528 = vpop.f32.mrf.mxu0
      %v529 = vadd.f32 %v370, %v528
      %530 = vdwg.mxu0
      %vm531 = vcmp.ge.f32.partialorder %v482, 0.0
      %vm532 = vcmp.ge.f32.partialorder %v484, 0.0
      %vm533 = vcmp.ge.f32.partialorder %v487, 0.0
      %vm534 = vcmp.ge.f32.partialorder %v489, 0.0
      %vm535 = vcmp.ge.f32.partialorder %v492, 0.0
      %vm536 = vcmp.ge.f32.partialorder %v494, 0.0
      %vm537 = vcmp.ge.f32.partialorder %v497, 0.0
      %vm538 = vcmp.ge.f32.partialorder %v499, 0.0
      %vm539 = vcmp.ge.f32.partialorder %v502, 0.0
      %vm540 = vcmp.ge.f32.partialorder %v504, 0.0
      %vm541 = vcmp.ge.f32.partialorder %v507, 0.0
      %vm542 = vcmp.ge.f32.partialorder %v509, 0.0
      %vm543 = vcmp.ge.f32.partialorder %v512, 0.0
      %vm544 = vcmp.ge.f32.partialorder %v514, 0.0
      %vm545 = vcmp.ge.f32.partialorder %v517, 0.0
      %vm546 = vcmp.ge.f32.partialorder %v519, 0.0
      %vm547 = vcmp.ge.f32.partialorder %v522, 0.0
      %vm548 = vcmp.ge.f32.partialorder %v524, 0.0
      %vm549 = vcmp.ge.f32.partialorder %v527, 0.0
      %vm550 = vcmp.ge.f32.partialorder %v529, 0.0
      %v551 = vmul.f32 %v482, 0.1
      %v552 = vmul.f32 %v484, 0.1
      %v553 = vmul.f32 %v487, 0.1
      %v554 = vmul.f32 %v489, 0.1
      %v555 = vmul.f32 %v492, 0.1
      %v556 = vmul.f32 %v494, 0.1
      %v557 = vmul.f32 %v497, 0.1
      %v558 = vmul.f32 %v499, 0.1
      %v559 = vmul.f32 %v502, 0.1
      %v560 = vmul.f32 %v504, 0.1
      %v561 = vmul.f32 %v507, 0.1
      %v562 = vmul.f32 %v509, 0.1
      %v563 = vmul.f32 %v512, 0.1
      %v564 = vmul.f32 %v514, 0.1
      %v565 = vmul.f32 %v517, 0.1
      %v566 = vmul.f32 %v519, 0.1
      %v567 = vmul.f32 %v522, 0.1
      %v568 = vmul.f32 %v524, 0.1
      %v569 = vmul.f32 %v527, 0.1
      %v570 = vmul.f32 %v529, 0.1
      %v571 = vsel %vm531, %v482, %v551
      %v572 = vsel %vm532, %v484, %v552
      %v573 = vsel %vm533, %v487, %v553
      %v574 = vsel %vm534, %v489, %v554
      %v575 = vsel %vm535, %v492, %v555
      %v576 = vsel %vm536, %v494, %v556
      %v577 = vsel %vm537, %v497, %v557
      %v578 = vsel %vm538, %v499, %v558
      %v579 = vsel %vm539, %v502, %v559
      %v580 = vsel %vm540, %v504, %v560
      %v581 = vsel %vm541, %v507, %v561
      %v582 = vsel %vm542, %v509, %v562
      %v583 = vsel %vm543, %v512, %v563
      %v584 = vsel %vm544, %v514, %v564
      %v585 = vsel %vm545, %v517, %v565
      %v586 = vsel %vm546, %v519, %v566
      %v587 = vsel %vm547, %v522, %v567
      %v588 = vsel %vm548, %v524, %v568
      %v589 = vsel %vm549, %v527, %v569
      %v590 = vsel %vm550, %v529, %v570
      %v591 = vpack.c.bf16 %v571, %v571
      %v592 = vpack.c.bf16 %v572, %v572
      %v593 = vpack.c.bf16 %v573, %v573
      %v594 = vpack.c.bf16 %v574, %v574
      %v595 = vpack.c.bf16 %v575, %v575
      %v596 = vpack.c.bf16 %v576, %v576
      %v597 = vpack.c.bf16 %v577, %v577
      %v598 = vpack.c.bf16 %v578, %v578
      %v599 = vpack.c.bf16 %v579, %v579
      %v600 = vpack.c.bf16 %v580, %v580
      %v601 = vpack.c.bf16 %v581, %v581
      %v602 = vpack.c.bf16 %v582, %v582
      %v603 = vpack.c.bf16 %v583, %v583
      %v604 = vpack.c.bf16 %v584, %v584
      %v605 = vpack.c.bf16 %v585, %v585
      %v606 = vpack.c.bf16 %v586, %v586
      %v607 = vpack.c.bf16 %v587, %v587
      %v608 = vpack.c.bf16 %v588, %v588
      %v609 = vpack.c.bf16 %v589, %v589
      %v610 = vpack.c.bf16 %v590, %v590
      %vm611 = vsmask.f32 256
      %vm612 = vsmask.f32 4368
      %vm613 = vmor %vm611, %vm612
      %v615 = vshrl.u32 %v591, 16
      %v617 = vrot.slane %v615, 7
      %v618 = vshll.u32 %v591, 16
      %v620 = vor.u32 %v617, %v618
      %v621 = vrot.slane %v617, 4
      %v623 = vshrl.u32 %v592, 16
      %v625 = vrot.slane %v623, 7
      %v626 = vshll.u32 %v592, 16
      %v628 = vor.u32 %v625, %v626
      %v629 = vsel %vm613, %v621, %v628
      %v630 = vrot.slane %v625, 4
      %v632 = vshrl.u32 %v593, 16
      %v634 = vrot.slane %v632, 7
      %v635 = vshll.u32 %v593, 16
      %v637 = vor.u32 %v634, %v635
      %v638 = vrot.slane %v634, 4
      %v640 = vshrl.u32 %v594, 16
      %v642 = vrot.slane %v640, 7
      %v643 = vshll.u32 %v594, 16
      %v645 = vor.u32 %v642, %v643
      %v646 = vsel %vm613, %v638, %v645
      %v647 = vrot.slane %v642, 4
      %v649 = vshrl.u32 %v595, 16
      %v651 = vrot.slane %v649, 7
      %v652 = vshll.u32 %v595, 16
      %v654 = vor.u32 %v651, %v652
      %v655 = vrot.slane %v651, 4
      %v657 = vshrl.u32 %v596, 16
      %v659 = vrot.slane %v657, 7
      %v660 = vshll.u32 %v596, 16
      %v662 = vor.u32 %v659, %v660
      %v663 = vsel %vm613, %v655, %v662
      %v664 = vrot.slane %v659, 4
      %v666 = vshrl.u32 %v597, 16
      %v668 = vrot.slane %v666, 7
      %v669 = vshll.u32 %v597, 16
      %v671 = vor.u32 %v668, %v669
      %v672 = vrot.slane %v668, 4
      %v674 = vshrl.u32 %v598, 16
      %v676 = vrot.slane %v674, 7
      %v677 = vshll.u32 %v598, 16
      %v679 = vor.u32 %v676, %v677
      %v680 = vsel %vm613, %v672, %v679
      %v681 = vrot.slane %v676, 4
      %v683 = vshrl.u32 %v599, 16
      %v685 = vrot.slane %v683, 7
      %v686 = vshll.u32 %v599, 16
      %v688 = vor.u32 %v685, %v686
      %v689 = vrot.slane %v685, 4
      %v691 = vshrl.u32 %v600, 16
      %v693 = vrot.slane %v691, 7
      %v694 = vshll.u32 %v600, 16
      %v696 = vor.u32 %v693, %v694
      %v697 = vsel %vm613, %v689, %v696
      %v698 = vrot.slane %v693, 4
      %v700 = vshrl.u32 %v601, 16
      %v702 = vrot.slane %v700, 7
      %v703 = vshll.u32 %v601, 16
      %v705 = vor.u32 %v702, %v703
      %v706 = vrot.slane %v702, 4
      %v708 = vshrl.u32 %v602, 16
      %v710 = vrot.slane %v708, 7
      %v711 = vshll.u32 %v602, 16
      %v713 = vor.u32 %v710, %v711
      %v714 = vsel %vm613, %v706, %v713
      %v715 = vrot.slane %v710, 4
      %v717 = vshrl.u32 %v603, 16
      %v719 = vrot.slane %v717, 7
      %v720 = vshll.u32 %v603, 16
      %v722 = vor.u32 %v719, %v720
      %v723 = vrot.slane %v719, 4
      %v725 = vshrl.u32 %v604, 16
      %v727 = vrot.slane %v725, 7
      %v728 = vshll.u32 %v604, 16
      %v730 = vor.u32 %v727, %v728
      %v731 = vsel %vm613, %v723, %v730
      %v732 = vrot.slane %v727, 4
      %v734 = vshrl.u32 %v605, 16
      %v736 = vrot.slane %v734, 7
      %v737 = vshll.u32 %v605, 16
      %v739 = vor.u32 %v736, %v737
      %v740 = vrot.slane %v736, 4
      %v742 = vshrl.u32 %v606, 16
      %v744 = vrot.slane %v742, 7
      %v745 = vshll.u32 %v606, 16
      %v747 = vor.u32 %v744, %v745
      %v748 = vsel %vm613, %v740, %v747
      %v749 = vrot.slane %v744, 4
      %v751 = vshrl.u32 %v607, 16
      %v753 = vrot.slane %v751, 7
      %v754 = vshll.u32 %v607, 16
      %v756 = vor.u32 %v753, %v754
      %v757 = vrot.slane %v753, 4
      %v759 = vshrl.u32 %v608, 16
      %v761 = vrot.slane %v759, 7
      %v762 = vshll.u32 %v608, 16
      %v764 = vor.u32 %v761, %v762
      %v765 = vsel %vm613, %v757, %v764
      %v766 = vrot.slane %v761, 4
      %v768 = vshrl.u32 %v609, 16
      %v770 = vrot.slane %v768, 7
      %v771 = vshll.u32 %v609, 16
      %v773 = vor.u32 %v770, %v771
      %v774 = vrot.slane %v770, 4
      %v776 = vshrl.u32 %v610, 16
      %v778 = vrot.slane %v776, 7
      %v779 = vshll.u32 %v610, 16
      %v781 = vor.u32 %v778, %v779
      %v782 = vsel %vm613, %v774, %v781
      %v783 = vrot.slane %v778, 4
      %vm814 = vcmask 1043456
      %vm815 = vsmask.f32 7938
      %vm816 = vmand %vm814, %vm815
      %v817 = vld [vmem:[#allocation2] sm:$0xf]
      %v818 = vsel %vm816, %v620, %v817
      %819 = vst [vmem:[#allocation2] sm:$0xf] %v818
      %820 = vst [vmem:[#allocation2 + $0x4] sm:$0xf] %v629
      %vm821 = vcmask 1040384
      %vm822 = vmand %vm821, %vm611
      %v823 = vld [vmem:[#allocation2 + $0x8] sm:$0x1]
      %v824 = vsel %vm822, %v630, %v823
      %825 = vst [vmem:[#allocation2 + $0x8] sm:$0x1] %v824
      %v826 = vld [vmem:[#allocation2 + $0xc] sm:$0xf]
      %v827 = vsel %vm816, %v637, %v826
      %828 = vst [vmem:[#allocation2 + $0xc] sm:$0xf] %v827
      %829 = vst [vmem:[#allocation2 + $0x10] sm:$0xf] %v646
      %v830 = vld [vmem:[#allocation2 + $0x14] sm:$0x1]
      %v831 = vsel %vm822, %v647, %v830
      %832 = vst [vmem:[#allocation2 + $0x14] sm:$0x1] %v831
      %v833 = vld [vmem:[#allocation2 + $0x18] sm:$0xf]
      %v834 = vsel %vm816, %v654, %v833
      %835 = vst [vmem:[#allocation2 + $0x18] sm:$0xf] %v834
      %836 = vst [vmem:[#allocation2 + $0x1c] sm:$0xf] %v663
      %v837 = vld [vmem:[#allocation2 + $0x20] sm:$0x1]
      %v838 = vsel %vm822, %v664, %v837
      %839 = vst [vmem:[#allocation2 + $0x20] sm:$0x1] %v838
      %v840 = vld [vmem:[#allocation2 + $0x24] sm:$0xf]
      %v841 = vsel %vm816, %v671, %v840
      %842 = vst [vmem:[#allocation2 + $0x24] sm:$0xf] %v841
      %843 = vst [vmem:[#allocation2 + $0x28] sm:$0xf] %v680
      %v844 = vld [vmem:[#allocation2 + $0x2c] sm:$0x1]
      %v845 = vsel %vm822, %v681, %v844
      %846 = vst [vmem:[#allocation2 + $0x2c] sm:$0x1] %v845
      %v847 = vld [vmem:[#allocation2 + $0x30] sm:$0xf]
      %v848 = vsel %vm816, %v688, %v847
      %849 = vst [vmem:[#allocation2 + $0x30] sm:$0xf] %v848
      %850 = vst [vmem:[#allocation2 + $0x34] sm:$0xf] %v697
      %v851 = vld [vmem:[#allocation2 + $0x38] sm:$0x1]
      %v852 = vsel %vm822, %v698, %v851
      %853 = vst [vmem:[#allocation2 + $0x38] sm:$0x1] %v852
      %v854 = vld [vmem:[#allocation2 + $0x3c] sm:$0xf]
      %v855 = vsel %vm816, %v705, %v854
      %856 = vst [vmem:[#allocation2 + $0x3c] sm:$0xf] %v855
      %857 = vst [vmem:[#allocation2 + $0x40] sm:$0xf] %v714
      %v858 = vld [vmem:[#allocation2 + $0x44] sm:$0x1]
      %v859 = vsel %vm822, %v715, %v858
      %860 = vst [vmem:[#allocation2 + $0x44] sm:$0x1] %v859
      %v861 = vld [vmem:[#allocation2 + $0x48] sm:$0xf]
      %v862 = vsel %vm816, %v722, %v861
      %863 = vst [vmem:[#allocation2 + $0x48] sm:$0xf] %v862
      %864 = vst [vmem:[#allocation2 + $0x4c] sm:$0xf] %v731
      %v865 = vld [vmem:[#allocation2 + $0x50] sm:$0x1]
      %v866 = vsel %vm822, %v732, %v865
      %867 = vst [vmem:[#allocation2 + $0x50] sm:$0x1] %v866
      %v868 = vld [vmem:[#allocation2 + $0x54] sm:$0xf]
      %v869 = vsel %vm816, %v739, %v868
      %870 = vst [vmem:[#allocation2 + $0x54] sm:$0xf] %v869
      %871 = vst [vmem:[#allocation2 + $0x58] sm:$0xf] %v748
      %v872 = vld [vmem:[#allocation2 + $0x5c] sm:$0x1]
      %v873 = vsel %vm822, %v749, %v872
      %874 = vst [vmem:[#allocation2 + $0x5c] sm:$0x1] %v873
      %v875 = vld [vmem:[#allocation2 + $0x60] sm:$0xf]
      %v876 = vsel %vm816, %v756, %v875
      %877 = vst [vmem:[#allocation2 + $0x60] sm:$0xf] %v876
      %878 = vst [vmem:[#allocation2 + $0x64] sm:$0xf] %v765
      %v879 = vld [vmem:[#allocation2 + $0x68] sm:$0x1]
      %v880 = vsel %vm822, %v766, %v879
      %881 = vst [vmem:[#allocation2 + $0x68] sm:$0x1] %v880
      %v882 = vld [vmem:[#allocation2 + $0x6c] sm:$0xf]
      %v883 = vsel %vm816, %v773, %v882
      %884 = vst [vmem:[#allocation2 + $0x6c] sm:$0xf] %v883
      %885 = vst [vmem:[#allocation2 + $0x70] sm:$0xf] %v782
      %v886 = vld [vmem:[#allocation2 + $0x74] sm:$0x1]
      %v887 = vsel %vm822, %v783, %v886
      %888 = vst [vmem:[#allocation2 + $0x74] sm:$0x1] %v887
      %v889 = vld [vmem:[#allocation2] sm:$0x1]
      %v890 = vsel %vm822, 0, %v889
      %891 = vst [vmem:[#allocation2] sm:$0x1] %v890
      %v892 = vld [vmem:[#allocation2 + $0xc] sm:$0x1]
      %v893 = vsel %vm822, 0, %v892
      %894 = vst [vmem:[#allocation2 + $0xc] sm:$0x1] %v893
      %v895 = vld [vmem:[#allocation2 + $0x18] sm:$0x1]
      %v896 = vsel %vm822, 0, %v895
      %897 = vst [vmem:[#allocation2 + $0x18] sm:$0x1] %v896
      %v898 = vld [vmem:[#allocation2 + $0x24] sm:$0x1]
      %v899 = vsel %vm822, 0, %v898
      %900 = vst [vmem:[#allocation2 + $0x24] sm:$0x1] %v899
      %v901 = vld [vmem:[#allocation2 + $0x30] sm:$0x1]
      %v902 = vsel %vm822, 0, %v901
      %903 = vst [vmem:[#allocation2 + $0x30] sm:$0x1] %v902
      %v904 = vld [vmem:[#allocation2 + $0x3c] sm:$0x1]
      %v905 = vsel %vm822, 0, %v904
      %906 = vst [vmem:[#allocation2 + $0x3c] sm:$0x1] %v905
      %v907 = vld [vmem:[#allocation2 + $0x48] sm:$0x1]
      %v908 = vsel %vm822, 0, %v907
      %909 = vst [vmem:[#allocation2 + $0x48] sm:$0x1] %v908
      %v910 = vld [vmem:[#allocation2 + $0x54] sm:$0x1]
      %v911 = vsel %vm822, 0, %v910
      %912 = vst [vmem:[#allocation2 + $0x54] sm:$0x1] %v911
      %v913 = vld [vmem:[#allocation2 + $0x60] sm:$0x1]
      %v914 = vsel %vm822, 0, %v913
      %915 = vst [vmem:[#allocation2 + $0x60] sm:$0x1] %v914
      %v916 = vld [vmem:[#allocation2 + $0x6c] sm:$0x1]
      %v917 = vsel %vm822, 0, %v916
      %918 = vst [vmem:[#allocation2 + $0x6c] sm:$0x1] %v917
      %vm919 = vmand %vm821, %vm815
      %v920 = vld [vmem:[#allocation2 + $0x8] sm:$0x1]
      %v921 = vsel %vm919, 0, %v920
      %922 = vst [vmem:[#allocation2 + $0x8] sm:$0x1] %v921
      %v923 = vld [vmem:[#allocation2 + $0x14] sm:$0x1]
      %v924 = vsel %vm919, 0, %v923
      %925 = vst [vmem:[#allocation2 + $0x14] sm:$0x1] %v924
      %v926 = vld [vmem:[#allocation2 + $0x20] sm:$0x1]
      %v927 = vsel %vm919, 0, %v926
      %928 = vst [vmem:[#allocation2 + $0x20] sm:$0x1] %v927
      %v929 = vld [vmem:[#allocation2 + $0x2c] sm:$0x1]
      %v930 = vsel %vm919, 0, %v929
      %931 = vst [vmem:[#allocation2 + $0x2c] sm:$0x1] %v930
      %v932 = vld [vmem:[#allocation2 + $0x38] sm:$0x1]
      %v933 = vsel %vm919, 0, %v932
      %934 = vst [vmem:[#allocation2 + $0x38] sm:$0x1] %v933
      %v935 = vld [vmem:[#allocation2 + $0x44] sm:$0x1]
      %v936 = vsel %vm919, 0, %v935
      %937 = vst [vmem:[#allocation2 + $0x44] sm:$0x1] %v936
      %v938 = vld [vmem:[#allocation2 + $0x50] sm:$0x1]
      %v939 = vsel %vm919, 0, %v938
      %940 = vst [vmem:[#allocation2 + $0x50] sm:$0x1] %v939
      %v941 = vld [vmem:[#allocation2 + $0x5c] sm:$0x1]
      %v942 = vsel %vm919, 0, %v941
      %943 = vst [vmem:[#allocation2 + $0x5c] sm:$0x1] %v942
      %v944 = vld [vmem:[#allocation2 + $0x68] sm:$0x1]
      %v945 = vsel %vm919, 0, %v944
      %946 = vst [vmem:[#allocation2 + $0x68] sm:$0x1] %v945
      %v947 = vld [vmem:[#allocation2 + $0x74] sm:$0x1]
      %v948 = vsel %vm919, 0, %v947
      %949 = vst [vmem:[#allocation2 + $0x74] sm:$0x1] %v948
      %p950 = scmp.eq.s32.totalorder %s22, 0
      // Predicated region
      $region45: #{_lambda_.1} parent=43 // pred_check
        %p951 = pneg %p950
      $region46: #{_lambda_.1} parent=43 // pred_check_branch
        %953 = sbr.rel (%p951) target = $region48
      $region47: #{_lambda_.1} parent=43 // pred_region
        %954 = vst [vmem:[#allocation2] sm:$0xf] 0
        %955 = vst [vmem:[#allocation2 + $0x4] sm:$0xf] 0
        %956 = vst [vmem:[#allocation2 + $0x8] sm:$0x1] 0
      $region48: #{_lambda_.1} parent=43 // pred_fallthru
        _
      %p957 = scmp.eq.s32.totalorder %s22, 1
      // Predicated region
      $region49: #{_lambda_.1} parent=43 // pred_check
        %p958 = pneg %p957
      $region50: #{_lambda_.1} parent=43 // pred_check_branch
        %960 = sbr.rel (%p958) target = $region52
      $region51: #{_lambda_.1} parent=43 // pred_region
        %s961 = scalar_lea.vmem [#allocation2], 108
        %962 = vst [vmem:[%s961] sm:$0xf] 0
        %963 = vst [vmem:[%s961 + $0x4] sm:$0xf] 0
        %964 = vst [vmem:[%s961 + $0x8] sm:$0x1] 0
      $region52: #{_lambda_.1} parent=43 // pred_fallthru
        _
      %v965 = vld [vmem:[#allocation2] sm:$0xf]
      %v966 = vld [vmem:[#allocation2 + $0x4] sm:$0xf]
      %v967 = vld [vmem:[#allocation2 + $0xc] sm:$0xf]
      %v968 = vld [vmem:[#allocation2 + $0x10] sm:$0xf]
      %v969 = vld [vmem:[#allocation2 + $0x18] sm:$0xf]
      %v970 = vld [vmem:[#allocation2 + $0x1c] sm:$0xf]
      %v971 = vld [vmem:[#allocation2 + $0x24] sm:$0xf]
      %v972 = vld [vmem:[#allocation2 + $0x28] sm:$0xf]
      %v973 = vld [vmem:[#allocation2 + $0x30] sm:$0xf]
      %v974 = vld [vmem:[#allocation2 + $0x34] sm:$0xf]
      %v975 = vld [vmem:[#allocation2 + $0x3c] sm:$0xf]
      %v976 = vld [vmem:[#allocation2 + $0x40] sm:$0xf]
      %v977 = vld [vmem:[#allocation2 + $0x48] sm:$0xf]
      %v978 = vld [vmem:[#allocation2 + $0x4c] sm:$0xf]
      %v979 = vld [vmem:[#allocation2 + $0x54] sm:$0xf]
      %v980 = vld [vmem:[#allocation2 + $0x58] sm:$0xf]
      %s981 = scalar_lea.vmem [#allocation2], 12
      %v982 = vld [vmem:[%s981] sm:$0xf]
      %v983 = vld [vmem:[%s981 + $0x4] sm:$0xf]
      %v984 = vld [vmem:[%s981 + $0xc] sm:$0xf]
      %v985 = vld [vmem:[%s981 + $0x10] sm:$0xf]
      %v986 = vld [vmem:[%s981 + $0x18] sm:$0xf]
      %v987 = vld [vmem:[%s981 + $0x1c] sm:$0xf]
      %v988 = vld [vmem:[%s981 + $0x24] sm:$0xf]
      %v989 = vld [vmem:[%s981 + $0x28] sm:$0xf]
      %v990 = vld [vmem:[%s981 + $0x30] sm:$0xf]
      %v991 = vld [vmem:[%s981 + $0x34] sm:$0xf]
      %v992 = vld [vmem:[%s981 + $0x3c] sm:$0xf]
      %v993 = vld [vmem:[%s981 + $0x40] sm:$0xf]
      %v994 = vld [vmem:[%s981 + $0x48] sm:$0xf]
      %v995 = vld [vmem:[%s981 + $0x4c] sm:$0xf]
      %v996 = vld [vmem:[%s981 + $0x54] sm:$0xf]
      %v997 = vld [vmem:[%s981 + $0x58] sm:$0xf]
      %s998 = scalar_lea.vmem [#allocation2], 24
      %v999 = vld [vmem:[%s998] sm:$0xf]
      %v1000 = vld [vmem:[%s998 + $0x4] sm:$0xf]
      %v1001 = vld [vmem:[%s998 + $0xc] sm:$0xf]
      %v1002 = vld [vmem:[%s998 + $0x10] sm:$0xf]
      %v1003 = vld [vmem:[%s998 + $0x18] sm:$0xf]
      %v1004 = vld [vmem:[%s998 + $0x1c] sm:$0xf]
      %v1005 = vld [vmem:[%s998 + $0x24] sm:$0xf]
      %v1006 = vld [vmem:[%s998 + $0x28] sm:$0xf]
      %v1007 = vld [vmem:[%s998 + $0x30] sm:$0xf]
      %v1008 = vld [vmem:[%s998 + $0x34] sm:$0xf]
      %v1009 = vld [vmem:[%s998 + $0x3c] sm:$0xf]
      %v1010 = vld [vmem:[%s998 + $0x40] sm:$0xf]
      %v1011 = vld [vmem:[%s998 + $0x48] sm:$0xf]
      %v1012 = vld [vmem:[%s998 + $0x4c] sm:$0xf]
      %v1013 = vld [vmem:[%s998 + $0x54] sm:$0xf]
      %v1014 = vld [vmem:[%s998 + $0x58] sm:$0xf]
      %v1031 = vunpack.c.l.b16 %v965
      %v1032 = vunpack.c.l.b16 %v966
      %v1033 = vunpack.c.l.b16 %v967
      %v1034 = vunpack.c.l.b16 %v968
      %v1035 = vunpack.c.l.b16 %v969
      %v1036 = vunpack.c.l.b16 %v970
      %v1037 = vunpack.c.l.b16 %v971
      %v1038 = vunpack.c.l.b16 %v972
      %v1039 = vunpack.c.l.b16 %v973
      %v1040 = vunpack.c.l.b16 %v974
      %v1041 = vunpack.c.l.b16 %v975
      %v1042 = vunpack.c.l.b16 %v976
      %v1043 = vunpack.c.l.b16 %v977
      %v1044 = vunpack.c.l.b16 %v978
      %v1045 = vunpack.c.l.b16 %v979
      %v1046 = vunpack.c.l.b16 %v980
      %v1047 = vpack.c.b16 %v1032, %v1031
      %v1048 = vpack.c.b16 %v1034, %v1033
      %v1049 = vpack.c.b16 %v1036, %v1035
      %v1050 = vpack.c.b16 %v1038, %v1037
      %v1051 = vpack.c.b16 %v1040, %v1039
      %v1052 = vpack.c.b16 %v1042, %v1041
      %v1053 = vpack.c.b16 %v1044, %v1043
      %v1054 = vpack.c.b16 %v1046, %v1045
      %v1079 = vunpack.c.l.b16 %v982
      %v1080 = vunpack.c.l.b16 %v983
      %v1081 = vunpack.c.l.b16 %v984
      %v1082 = vunpack.c.l.b16 %v985
      %v1083 = vunpack.c.l.b16 %v986
      %v1084 = vunpack.c.l.b16 %v987
      %v1085 = vunpack.c.l.b16 %v988
      %v1086 = vunpack.c.l.b16 %v989
      %v1087 = vunpack.c.l.b16 %v990
      %v1088 = vunpack.c.l.b16 %v991
      %v1089 = vunpack.c.l.b16 %v992
      %v1090 = vunpack.c.l.b16 %v993
      %v1091 = vunpack.c.l.b16 %v994
      %v1092 = vunpack.c.l.b16 %v995
      %v1093 = vunpack.c.l.b16 %v996
      %v1094 = vunpack.c.l.b16 %v997
      %v1095 = vpack.c.b16 %v1080, %v1079
      %v1096 = vpack.c.b16 %v1082, %v1081
      %v1097 = vpack.c.b16 %v1084, %v1083
      %v1098 = vpack.c.b16 %v1086, %v1085
      %v1099 = vpack.c.b16 %v1088, %v1087
      %v1100 = vpack.c.b16 %v1090, %v1089
      %v1101 = vpack.c.b16 %v1092, %v1091
      %v1102 = vpack.c.b16 %v1094, %v1093
      %v1127 = vunpack.c.l.b16 %v999
      %v1128 = vunpack.c.l.b16 %v1000
      %v1129 = vunpack.c.l.b16 %v1001
      %v1130 = vunpack.c.l.b16 %v1002
      %v1131 = vunpack.c.l.b16 %v1003
      %v1132 = vunpack.c.l.b16 %v1004
      %v1133 = vunpack.c.l.b16 %v1005
      %v1134 = vunpack.c.l.b16 %v1006
      %v1135 = vunpack.c.l.b16 %v1007
      %v1136 = vunpack.c.l.b16 %v1008
      %v1137 = vunpack.c.l.b16 %v1009
      %v1138 = vunpack.c.l.b16 %v1010
      %v1139 = vunpack.c.l.b16 %v1011
      %v1140 = vunpack.c.l.b16 %v1012
      %v1141 = vunpack.c.l.b16 %v1013
      %v1142 = vunpack.c.l.b16 %v1014
      %v1143 = vpack.c.b16 %v1128, %v1127
      %v1144 = vpack.c.b16 %v1130, %v1129
      %v1145 = vpack.c.b16 %v1132, %v1131
      %v1146 = vpack.c.b16 %v1134, %v1133
      %v1147 = vpack.c.b16 %v1136, %v1135
      %v1148 = vpack.c.b16 %v1138, %v1137
      %v1149 = vpack.c.b16 %v1140, %v1139
      %v1150 = vpack.c.b16 %v1142, %v1141
      %v1159 = vld [vmem:[%s4] sm:$0xf]
      %v1160 = vld [vmem:[%s4 + $0x4] sm:$0xf]
      %v1161 = vld [vmem:[%s4 + $0x8] sm:$0xf]
      %v1162 = vld [vmem:[%s4 + $0xc] sm:$0xf]
      %v1163 = vld [vmem:[%s4 + $0x10] sm:$0xf]
      %v1164 = vld [vmem:[%s4 + $0x14] sm:$0xf]
      %v1165 = vld [vmem:[%s4 + $0x18] sm:$0xf]
      %v1166 = vld [vmem:[%s4 + $0x1c] sm:$0xf]
      %v1167 = vld [vmem:[%s4 + $0x20] sm:$0xf]
      %v1168 = vld [vmem:[%s4 + $0x24] sm:$0xf]
      %v1169 = vld [vmem:[%s4 + $0x28] sm:$0xf]
      %v1170 = vld [vmem:[%s4 + $0x2c] sm:$0xf]
      %v1171 = vld [vmem:[%s4 + $0x30] sm:$0xf]
      %v1172 = vld [vmem:[%s4 + $0x34] sm:$0xf]
      %v1173 = vld [vmem:[%s4 + $0x38] sm:$0xf]
      %v1174 = vld [vmem:[%s4 + $0x3c] sm:$0xf]
      %v1175 = vld [vmem:[%s4 + $0x40] sm:$0xf]
      %v1176 = vld [vmem:[%s4 + $0x44] sm:$0xf]
      %v1177 = vld [vmem:[%s4 + $0x48] sm:$0xf]
      %v1178 = vld [vmem:[%s4 + $0x4c] sm:$0xf]
      %v1179 = vld [vmem:[%s4 + $0x50] sm:$0xf]
      %v1180 = vld [vmem:[%s4 + $0x54] sm:$0xf]
      %v1181 = vld [vmem:[%s4 + $0x58] sm:$0xf]
      %v1182 = vld [vmem:[%s4 + $0x5c] sm:$0xf]
      %v1183 = vld [vmem:[%s4 + $0x60] sm:$0xf]
      %v1184 = vld [vmem:[%s4 + $0x64] sm:$0xf]
      %v1185 = vld [vmem:[%s4 + $0x68] sm:$0xf]
      %v1186 = vld [vmem:[%s4 + $0x6c] sm:$0xf]
      %v1187 = vld [vmem:[%s4 + $0x70] sm:$0xf]
      %v1188 = vld [vmem:[%s4 + $0x74] sm:$0xf]
      %v1189 = vld [vmem:[%s4 + $0x78] sm:$0xf]
      %v1190 = vld [vmem:[%s4 + $0x7c] sm:$0xf]
      %v1191 = vld [vmem:[%s4 + $0x80] sm:$0xf]
      %v1192 = vld [vmem:[%s4 + $0x84] sm:$0xf]
      %v1193 = vld [vmem:[%s4 + $0x88] sm:$0xf]
      %v1194 = vld [vmem:[%s4 + $0x8c] sm:$0xf]
      %v1195 = vld [vmem:[%s4 + $0x90] sm:$0xf]
      %v1196 = vld [vmem:[%s4 + $0x94] sm:$0xf]
      %v1197 = vld [vmem:[%s4 + $0x98] sm:$0xf]
      %v1198 = vld [vmem:[%s4 + $0x9c] sm:$0xf]
      %v1199 = vld [vmem:[%s4 + $0xa0] sm:$0xf]
      %v1200 = vld [vmem:[%s4 + $0xa4] sm:$0xf]
      %v1201 = vld [vmem:[%s4 + $0xa8] sm:$0xf]
      %v1202 = vld [vmem:[%s4 + $0xac] sm:$0xf]
      %v1203 = vld [vmem:[%s4 + $0xb0] sm:$0xf]
      %v1204 = vld [vmem:[%s4 + $0xb4] sm:$0xf]
      %v1205 = vld [vmem:[%s4 + $0xb8] sm:$0xf]
      %v1206 = vld [vmem:[%s4 + $0xbc] sm:$0xf]
      %v1207 = vld [vmem:[#allocation2 + $0x8] sm:$0x1]
      %v1208 = vld [vmem:[#allocation2 + $0x14] sm:$0x1]
      %v1209 = vld [vmem:[#allocation2 + $0x20] sm:$0x1]
      %v1210 = vld [vmem:[#allocation2 + $0x2c] sm:$0x1]
      %v1211 = vld [vmem:[#allocation2 + $0x38] sm:$0x1]
      %v1212 = vld [vmem:[#allocation2 + $0x44] sm:$0x1]
      %v1213 = vld [vmem:[#allocation2 + $0x50] sm:$0x1]
      %v1214 = vld [vmem:[#allocation2 + $0x5c] sm:$0x1]
      %v1215 = vld [vmem:[%s981 + $0x8] sm:$0x1]
      %v1216 = vld [vmem:[%s981 + $0x14] sm:$0x1]
      %v1217 = vld [vmem:[%s981 + $0x20] sm:$0x1]
      %v1218 = vld [vmem:[%s981 + $0x2c] sm:$0x1]
      %v1219 = vld [vmem:[%s981 + $0x38] sm:$0x1]
      %v1220 = vld [vmem:[%s981 + $0x44] sm:$0x1]
      %v1221 = vld [vmem:[%s981 + $0x50] sm:$0x1]
      %v1222 = vld [vmem:[%s981 + $0x5c] sm:$0x1]
      %v1223 = vld [vmem:[%s998 + $0x8] sm:$0x1]
      %v1224 = vld [vmem:[%s998 + $0x14] sm:$0x1]
      %v1225 = vld [vmem:[%s998 + $0x20] sm:$0x1]
      %v1226 = vld [vmem:[%s998 + $0x2c] sm:$0x1]
      %v1227 = vld [vmem:[%s998 + $0x38] sm:$0x1]
      %v1228 = vld [vmem:[%s998 + $0x44] sm:$0x1]
      %v1229 = vld [vmem:[%s998 + $0x50] sm:$0x1]
      %v1230 = vld [vmem:[%s998 + $0x5c] sm:$0x1]
      %v1239 = vunpack.c.l.b16 %v1207
      %v1240 = vunpack.c.l.b16 %v1208
      %v1241 = vunpack.c.l.b16 %v1209
      %v1242 = vunpack.c.l.b16 %v1210
      %v1243 = vunpack.c.l.b16 %v1211
      %v1244 = vunpack.c.l.b16 %v1212
      %v1245 = vunpack.c.l.b16 %v1213
      %v1246 = vunpack.c.l.b16 %v1214
      %v1247 = vpack.c.b16 %v1239, %v1239
      %v1248 = vpack.c.b16 %v1240, %v1240
      %v1249 = vpack.c.b16 %v1241, %v1241
      %v1250 = vpack.c.b16 %v1242, %v1242
      %v1251 = vpack.c.b16 %v1243, %v1243
      %v1252 = vpack.c.b16 %v1244, %v1244
      %v1253 = vpack.c.b16 %v1245, %v1245
      %v1254 = vpack.c.b16 %v1246, %v1246
      %v1263 = vunpack.c.l.b16 %v1215
      %v1264 = vunpack.c.l.b16 %v1216
      %v1265 = vunpack.c.l.b16 %v1217
      %v1266 = vunpack.c.l.b16 %v1218
      %v1267 = vunpack.c.l.b16 %v1219
      %v1268 = vunpack.c.l.b16 %v1220
      %v1269 = vunpack.c.l.b16 %v1221
      %v1270 = vunpack.c.l.b16 %v1222
      %v1271 = vpack.c.b16 %v1263, %v1263
      %v1272 = vpack.c.b16 %v1264, %v1264
      %v1273 = vpack.c.b16 %v1265, %v1265
      %v1274 = vpack.c.b16 %v1266, %v1266
      %v1275 = vpack.c.b16 %v1267, %v1267
      %v1276 = vpack.c.b16 %v1268, %v1268
      %v1277 = vpack.c.b16 %v1269, %v1269
      %v1278 = vpack.c.b16 %v1270, %v1270
      %v1287 = vunpack.c.l.b16 %v1223
      %v1288 = vunpack.c.l.b16 %v1224
      %v1289 = vunpack.c.l.b16 %v1225
      %v1290 = vunpack.c.l.b16 %v1226
      %v1291 = vunpack.c.l.b16 %v1227
      %v1292 = vunpack.c.l.b16 %v1228
      %v1293 = vunpack.c.l.b16 %v1229
      %v1294 = vunpack.c.l.b16 %v1230
      %v1295 = vpack.c.b16 %v1287, %v1287
      %v1296 = vpack.c.b16 %v1288, %v1288
      %v1297 = vpack.c.b16 %v1289, %v1289
      %v1298 = vpack.c.b16 %v1290, %v1290
      %v1299 = vpack.c.b16 %v1291, %v1291
      %v1300 = vpack.c.b16 %v1292, %v1292
      %v1301 = vpack.c.b16 %v1293, %v1293
      %v1302 = vpack.c.b16 %v1294, %v1294
      %vm1303 = vsmask.f32 7424
      %v1305 = vshrl.u32 %v1047, 16
      %v1307 = vshll.u32 %v1047, 16
      %v1309 = vrot.slane %v1307, 1
      %v1310 = vor.u32 %v1305, %v1309
      %v1312 = vshll.u32 %v1247, 16
      %v1314 = vrot.slane %v1312, 1
      %v1315 = vsel %vm1303, %v1310, %v1314
      %v1317 = vshrl.u32 %v1095, 16
      %v1319 = vshll.u32 %v1095, 16
      %v1321 = vrot.slane %v1319, 1
      %v1322 = vor.u32 %v1317, %v1321
      %v1324 = vshll.u32 %v1271, 16
      %v1326 = vrot.slane %v1324, 1
      %v1327 = vsel %vm1303, %v1322, %v1326
      %v1329 = vshrl.u32 %v1143, 16
      %v1331 = vshll.u32 %v1143, 16
      %v1333 = vrot.slane %v1331, 1
      %v1334 = vor.u32 %v1329, %v1333
      %v1336 = vshll.u32 %v1295, 16
      %v1338 = vrot.slane %v1336, 1
      %v1339 = vsel %vm1303, %v1334, %v1338
      %v1341 = vshrl.u32 %v1048, 16
      %v1343 = vshll.u32 %v1048, 16
      %v1345 = vrot.slane %v1343, 1
      %v1346 = vor.u32 %v1341, %v1345
      %v1348 = vshll.u32 %v1248, 16
      %v1350 = vrot.slane %v1348, 1
      %v1351 = vsel %vm1303, %v1346, %v1350
      %v1353 = vshrl.u32 %v1096, 16
      %v1355 = vshll.u32 %v1096, 16
      %v1357 = vrot.slane %v1355, 1
      %v1358 = vor.u32 %v1353, %v1357
      %v1360 = vshll.u32 %v1272, 16
      %v1362 = vrot.slane %v1360, 1
      %v1363 = vsel %vm1303, %v1358, %v1362
      %v1365 = vshrl.u32 %v1144, 16
      %v1367 = vshll.u32 %v1144, 16
      %v1369 = vrot.slane %v1367, 1
      %v1370 = vor.u32 %v1365, %v1369
      %v1372 = vshll.u32 %v1296, 16
      %v1374 = vrot.slane %v1372, 1
      %v1375 = vsel %vm1303, %v1370, %v1374
      %v1377 = vshrl.u32 %v1049, 16
      %v1379 = vshll.u32 %v1049, 16
      %v1381 = vrot.slane %v1379, 1
      %v1382 = vor.u32 %v1377, %v1381
      %v1384 = vshll.u32 %v1249, 16
      %v1386 = vrot.slane %v1384, 1
      %v1387 = vsel %vm1303, %v1382, %v1386
      %v1389 = vshrl.u32 %v1097, 16
      %v1391 = vshll.u32 %v1097, 16
      %v1393 = vrot.slane %v1391, 1
      %v1394 = vor.u32 %v1389, %v1393
      %v1396 = vshll.u32 %v1273, 16
      %v1398 = vrot.slane %v1396, 1
      %v1399 = vsel %vm1303, %v1394, %v1398
      %v1401 = vshrl.u32 %v1145, 16
      %v1403 = vshll.u32 %v1145, 16
      %v1405 = vrot.slane %v1403, 1
      %v1406 = vor.u32 %v1401, %v1405
      %v1408 = vshll.u32 %v1297, 16
      %v1410 = vrot.slane %v1408, 1
      %v1411 = vsel %vm1303, %v1406, %v1410
      %v1413 = vshrl.u32 %v1050, 16
      %v1415 = vshll.u32 %v1050, 16
      %v1417 = vrot.slane %v1415, 1
      %v1418 = vor.u32 %v1413, %v1417
      %v1420 = vshll.u32 %v1250, 16
      %v1422 = vrot.slane %v1420, 1
      %v1423 = vsel %vm1303, %v1418, %v1422
      %v1425 = vshrl.u32 %v1098, 16
      %v1427 = vshll.u32 %v1098, 16
      %v1429 = vrot.slane %v1427, 1
      %v1430 = vor.u32 %v1425, %v1429
      %v1432 = vshll.u32 %v1274, 16
      %v1434 = vrot.slane %v1432, 1
      %v1435 = vsel %vm1303, %v1430, %v1434
      %v1437 = vshrl.u32 %v1146, 16
      %v1439 = vshll.u32 %v1146, 16
      %v1441 = vrot.slane %v1439, 1
      %v1442 = vor.u32 %v1437, %v1441
      %v1444 = vshll.u32 %v1298, 16
      %v1446 = vrot.slane %v1444, 1
      %v1447 = vsel %vm1303, %v1442, %v1446
      %v1449 = vshrl.u32 %v1051, 16
      %v1451 = vshll.u32 %v1051, 16
      %v1453 = vrot.slane %v1451, 1
      %v1454 = vor.u32 %v1449, %v1453
      %v1456 = vshll.u32 %v1251, 16
      %v1458 = vrot.slane %v1456, 1
      %v1459 = vsel %vm1303, %v1454, %v1458
      %v1461 = vshrl.u32 %v1099, 16
      %v1463 = vshll.u32 %v1099, 16
      %v1465 = vrot.slane %v1463, 1
      %v1466 = vor.u32 %v1461, %v1465
      %v1468 = vshll.u32 %v1275, 16
      %v1470 = vrot.slane %v1468, 1
      %v1471 = vsel %vm1303, %v1466, %v1470
      %v1473 = vshrl.u32 %v1147, 16
      %v1475 = vshll.u32 %v1147, 16
      %v1477 = vrot.slane %v1475, 1
      %v1478 = vor.u32 %v1473, %v1477
      %v1480 = vshll.u32 %v1299, 16
      %v1482 = vrot.slane %v1480, 1
      %v1483 = vsel %vm1303, %v1478, %v1482
      %v1485 = vshrl.u32 %v1052, 16
      %v1487 = vshll.u32 %v1052, 16
      %v1489 = vrot.slane %v1487, 1
      %v1490 = vor.u32 %v1485, %v1489
      %v1492 = vshll.u32 %v1252, 16
      %v1494 = vrot.slane %v1492, 1
      %v1495 = vsel %vm1303, %v1490, %v1494
      %v1497 = vshrl.u32 %v1100, 16
      %v1499 = vshll.u32 %v1100, 16
      %v1501 = vrot.slane %v1499, 1
      %v1502 = vor.u32 %v1497, %v1501
      %v1504 = vshll.u32 %v1276, 16
      %v1506 = vrot.slane %v1504, 1
      %v1507 = vsel %vm1303, %v1502, %v1506
      %v1509 = vshrl.u32 %v1148, 16
      %v1511 = vshll.u32 %v1148, 16
      %v1513 = vrot.slane %v1511, 1
      %v1514 = vor.u32 %v1509, %v1513
      %v1516 = vshll.u32 %v1300, 16
      %v1518 = vrot.slane %v1516, 1
      %v1519 = vsel %vm1303, %v1514, %v1518
      %v1521 = vshrl.u32 %v1053, 16
      %v1523 = vshll.u32 %v1053, 16
      %v1525 = vrot.slane %v1523, 1
      %v1526 = vor.u32 %v1521, %v1525
      %v1528 = vshll.u32 %v1253, 16
      %v1530 = vrot.slane %v1528, 1
      %v1531 = vsel %vm1303, %v1526, %v1530
      %v1533 = vshrl.u32 %v1101, 16
      %v1535 = vshll.u32 %v1101, 16
      %v1537 = vrot.slane %v1535, 1
      %v1538 = vor.u32 %v1533, %v1537
      %v1540 = vshll.u32 %v1277, 16
      %v1542 = vrot.slane %v1540, 1
      %v1543 = vsel %vm1303, %v1538, %v1542
      %v1545 = vshrl.u32 %v1149, 16
      %v1547 = vshll.u32 %v1149, 16
      %v1549 = vrot.slane %v1547, 1
      %v1550 = vor.u32 %v1545, %v1549
      %v1552 = vshll.u32 %v1301, 16
      %v1554 = vrot.slane %v1552, 1
      %v1555 = vsel %vm1303, %v1550, %v1554
      %v1557 = vshrl.u32 %v1054, 16
      %v1559 = vshll.u32 %v1054, 16
      %v1561 = vrot.slane %v1559, 1
      %v1562 = vor.u32 %v1557, %v1561
      %v1564 = vshll.u32 %v1254, 16
      %v1566 = vrot.slane %v1564, 1
      %v1567 = vsel %vm1303, %v1562, %v1566
      %v1569 = vshrl.u32 %v1102, 16
      %v1571 = vshll.u32 %v1102, 16
      %v1573 = vrot.slane %v1571, 1
      %v1574 = vor.u32 %v1569, %v1573
      %v1576 = vshll.u32 %v1278, 16
      %v1578 = vrot.slane %v1576, 1
      %v1579 = vsel %vm1303, %v1574, %v1578
      %v1581 = vshrl.u32 %v1150, 16
      %v1583 = vshll.u32 %v1150, 16
      %v1585 = vrot.slane %v1583, 1
      %v1586 = vor.u32 %v1581, %v1585
      %v1588 = vshll.u32 %v1302, 16
      %v1590 = vrot.slane %v1588, 1
      %v1591 = vsel %vm1303, %v1586, %v1590
      %s1616 = scalar_lea.vmem %s4, 192
      %v1617 = vld [vmem:[%s1616] sm:$0xf]
      %v1618 = vld [vmem:[%s1616 + $0x4] sm:$0xf]
      %v1619 = vld [vmem:[%s1616 + $0x8] sm:$0xf]
      %v1620 = vld [vmem:[%s1616 + $0xc] sm:$0xf]
      %v1621 = vld [vmem:[%s1616 + $0x10] sm:$0xf]
      %v1622 = vld [vmem:[%s1616 + $0x14] sm:$0xf]
      %v1623 = vld [vmem:[%s1616 + $0x18] sm:$0xf]
      %v1624 = vld [vmem:[%s1616 + $0x1c] sm:$0xf]
      %v1625 = vld [vmem:[%s1616 + $0x20] sm:$0xf]
      %v1626 = vld [vmem:[%s1616 + $0x24] sm:$0xf]
      %v1627 = vld [vmem:[%s1616 + $0x28] sm:$0xf]
      %v1628 = vld [vmem:[%s1616 + $0x2c] sm:$0xf]
      %v1629 = vld [vmem:[%s1616 + $0x30] sm:$0xf]
      %v1630 = vld [vmem:[%s1616 + $0x34] sm:$0xf]
      %v1631 = vld [vmem:[%s1616 + $0x38] sm:$0xf]
      %v1632 = vld [vmem:[%s1616 + $0x3c] sm:$0xf]
      %v1633 = vld [vmem:[%s1616 + $0x40] sm:$0xf]
      %v1634 = vld [vmem:[%s1616 + $0x44] sm:$0xf]
      %v1635 = vld [vmem:[%s1616 + $0x48] sm:$0xf]
      %v1636 = vld [vmem:[%s1616 + $0x4c] sm:$0xf]
      %v1637 = vld [vmem:[%s1616 + $0x50] sm:$0xf]
      %v1638 = vld [vmem:[%s1616 + $0x54] sm:$0xf]
      %v1639 = vld [vmem:[%s1616 + $0x58] sm:$0xf]
      %v1640 = vld [vmem:[%s1616 + $0x5c] sm:$0xf]
      %v1641 = vld [vmem:[%s1616 + $0x60] sm:$0xf]
      %v1642 = vld [vmem:[%s1616 + $0x64] sm:$0xf]
      %v1643 = vld [vmem:[%s1616 + $0x68] sm:$0xf]
      %v1644 = vld [vmem:[%s1616 + $0x6c] sm:$0xf]
      %v1645 = vld [vmem:[%s1616 + $0x70] sm:$0xf]
      %v1646 = vld [vmem:[%s1616 + $0x74] sm:$0xf]
      %v1647 = vld [vmem:[%s1616 + $0x78] sm:$0xf]
      %v1648 = vld [vmem:[%s1616 + $0x7c] sm:$0xf]
      %v1649 = vld [vmem:[%s1616 + $0x80] sm:$0xf]
      %v1650 = vld [vmem:[%s1616 + $0x84] sm:$0xf]
      %v1651 = vld [vmem:[%s1616 + $0x88] sm:$0xf]
      %v1652 = vld [vmem:[%s1616 + $0x8c] sm:$0xf]
      %v1653 = vld [vmem:[%s1616 + $0x90] sm:$0xf]
      %v1654 = vld [vmem:[%s1616 + $0x94] sm:$0xf]
      %v1655 = vld [vmem:[%s1616 + $0x98] sm:$0xf]
      %v1656 = vld [vmem:[%s1616 + $0x9c] sm:$0xf]
      %v1657 = vld [vmem:[%s1616 + $0xa0] sm:$0xf]
      %v1658 = vld [vmem:[%s1616 + $0xa4] sm:$0xf]
      %v1659 = vld [vmem:[%s1616 + $0xa8] sm:$0xf]
      %v1660 = vld [vmem:[%s1616 + $0xac] sm:$0xf]
      %v1661 = vld [vmem:[%s1616 + $0xb0] sm:$0xf]
      %v1662 = vld [vmem:[%s1616 + $0xb4] sm:$0xf]
      %v1663 = vld [vmem:[%s1616 + $0xb8] sm:$0xf]
      %v1664 = vld [vmem:[%s1616 + $0xbc] sm:$0xf]
      %v1713 = vunpack.c.l.b16 %v1617
      %v1714 = vunpack.c.l.b16 %v1618
      %v1715 = vunpack.c.l.b16 %v1619
      %v1716 = vunpack.c.l.b16 %v1620
      %v1717 = vunpack.c.l.b16 %v1621
      %v1718 = vunpack.c.l.b16 %v1622
      %v1719 = vunpack.c.l.b16 %v1623
      %v1720 = vunpack.c.l.b16 %v1624
      %v1721 = vunpack.c.l.b16 %v1625
      %v1722 = vunpack.c.l.b16 %v1626
      %v1723 = vunpack.c.l.b16 %v1627
      %v1724 = vunpack.c.l.b16 %v1628
      %v1725 = vunpack.c.l.b16 %v1629
      %v1726 = vunpack.c.l.b16 %v1630
      %v1727 = vunpack.c.l.b16 %v1631
      %v1728 = vunpack.c.l.b16 %v1632
      %v1729 = vunpack.c.l.b16 %v1633
      %v1730 = vunpack.c.l.b16 %v1634
      %v1731 = vunpack.c.l.b16 %v1635
      %v1732 = vunpack.c.l.b16 %v1636
      %v1733 = vunpack.c.l.b16 %v1637
      %v1734 = vunpack.c.l.b16 %v1638
      %v1735 = vunpack.c.l.b16 %v1639
      %v1736 = vunpack.c.l.b16 %v1640
      %v1737 = vunpack.c.l.b16 %v1641
      %v1738 = vunpack.c.l.b16 %v1642
      %v1739 = vunpack.c.l.b16 %v1643
      %v1740 = vunpack.c.l.b16 %v1644
      %v1741 = vunpack.c.l.b16 %v1645
      %v1742 = vunpack.c.l.b16 %v1646
      %v1743 = vunpack.c.l.b16 %v1647
      %v1744 = vunpack.c.l.b16 %v1648
      %v1745 = vunpack.c.l.b16 %v1649
      %v1746 = vunpack.c.l.b16 %v1650
      %v1747 = vunpack.c.l.b16 %v1651
      %v1748 = vunpack.c.l.b16 %v1652
      %v1749 = vunpack.c.l.b16 %v1653
      %v1750 = vunpack.c.l.b16 %v1654
      %v1751 = vunpack.c.l.b16 %v1655
      %v1752 = vunpack.c.l.b16 %v1656
      %v1753 = vunpack.c.l.b16 %v1657
      %v1754 = vunpack.c.l.b16 %v1658
      %v1755 = vunpack.c.l.b16 %v1659
      %v1756 = vunpack.c.l.b16 %v1660
      %v1757 = vunpack.c.l.b16 %v1661
      %v1758 = vunpack.c.l.b16 %v1662
      %v1759 = vunpack.c.l.b16 %v1663
      %v1760 = vunpack.c.l.b16 %v1664
      %v1761 = vpack.c.b16 %v1714, %v1713
      %v1762 = vpack.c.b16 %v1716, %v1715
      %v1763 = vpack.c.b16 %v1718, %v1717
      %v1764 = vpack.c.b16 %v1720, %v1719
      %v1765 = vpack.c.b16 %v1722, %v1721
      %v1766 = vpack.c.b16 %v1724, %v1723
      %v1767 = vpack.c.b16 %v1726, %v1725
      %v1768 = vpack.c.b16 %v1728, %v1727
      %v1769 = vpack.c.b16 %v1730, %v1729
      %v1770 = vpack.c.b16 %v1732, %v1731
      %v1771 = vpack.c.b16 %v1734, %v1733
      %v1772 = vpack.c.b16 %v1736, %v1735
      %v1773 = vpack.c.b16 %v1738, %v1737
      %v1774 = vpack.c.b16 %v1740, %v1739
      %v1775 = vpack.c.b16 %v1742, %v1741
      %v1776 = vpack.c.b16 %v1744, %v1743
      %v1777 = vpack.c.b16 %v1746, %v1745
      %v1778 = vpack.c.b16 %v1748, %v1747
      %v1779 = vpack.c.b16 %v1750, %v1749
      %v1780 = vpack.c.b16 %v1752, %v1751
      %v1781 = vpack.c.b16 %v1754, %v1753
      %v1782 = vpack.c.b16 %v1756, %v1755
      %v1783 = vpack.c.b16 %v1758, %v1757
      %v1784 = vpack.c.b16 %v1760, %v1759
      %1809 = vmatpush.bf16.msra.mxu0 %v1768
      %1810 = vmatpush.bf16.msra.mxu0 %v1767
      %1811 = vmatpush.bf16.msra.mxu0 %v1766
      %1812 = vmatpush.bf16.msra.mxu0 %v1765
      %1813 = vmatpush.bf16.msra.mxu0 %v1764
      %1814 = vmatpush.bf16.msra.mxu0 %v1763
      %1815 = vmatpush.bf16.msra.mxu0 %v1762
      %1816 = vmatpush.bf16.msra.mxu0 %v1761
      %1817 = vmatmul.bf16.gmra.mxu0 %v1315
      %v1818 = vpop.f32.mrf.mxu0
      %v1819 = vadd.f32 0.0, %v1818
      %v1820 = vpop.f32.mrf.mxu0
      %v1821 = vadd.f32 0.0, %v1820
      %1822 = vmatmul.bf16.gmra.mxu0 %v1351
      %v1823 = vpop.f32.mrf.mxu0
      %v1824 = vadd.f32 0.0, %v1823
      %v1825 = vpop.f32.mrf.mxu0
      %v1826 = vadd.f32 0.0, %v1825
      %1827 = vmatmul.bf16.gmra.mxu0 %v1387
      %v1828 = vpop.f32.mrf.mxu0
      %v1829 = vadd.f32 0.0, %v1828
      %v1830 = vpop.f32.mrf.mxu0
      %v1831 = vadd.f32 0.0, %v1830
      %1832 = vmatmul.bf16.gmra.mxu0 %v1423
      %v1833 = vpop.f32.mrf.mxu0
      %v1834 = vadd.f32 0.0, %v1833
      %v1835 = vpop.f32.mrf.mxu0
      %v1836 = vadd.f32 0.0, %v1835
      %1837 = vmatmul.bf16.gmra.mxu0 %v1459
      %v1838 = vpop.f32.mrf.mxu0
      %v1839 = vadd.f32 0.0, %v1838
      %v1840 = vpop.f32.mrf.mxu0
      %v1841 = vadd.f32 0.0, %v1840
      %1842 = vmatmul.bf16.gmra.mxu0 %v1495
      %v1843 = vpop.f32.mrf.mxu0
      %v1844 = vadd.f32 0.0, %v1843
      %v1845 = vpop.f32.mrf.mxu0
      %v1846 = vadd.f32 0.0, %v1845
      %1847 = vmatmul.bf16.gmra.mxu0 %v1531
      %v1848 = vpop.f32.mrf.mxu0
      %v1849 = vadd.f32 0.0, %v1848
      %v1850 = vpop.f32.mrf.mxu0
      %v1851 = vadd.f32 0.0, %v1850
      %1852 = vmatmul.bf16.gmra.mxu0 %v1567
      %v1853 = vpop.f32.mrf.mxu0
      %v1854 = vadd.f32 0.0, %v1853
      %v1855 = vpop.f32.mrf.mxu0
      %v1856 = vadd.f32 0.0, %v1855
      %1857 = vdwg.mxu0
      %1858 = vmatpush.bf16.msra.mxu0 %v1776
      %1859 = vmatpush.bf16.msra.mxu0 %v1775
      %1860 = vmatpush.bf16.msra.mxu0 %v1774
      %1861 = vmatpush.bf16.msra.mxu0 %v1773
      %1862 = vmatpush.bf16.msra.mxu0 %v1772
      %1863 = vmatpush.bf16.msra.mxu0 %v1771
      %1864 = vmatpush.bf16.msra.mxu0 %v1770
      %1865 = vmatpush.bf16.msra.mxu0 %v1769
      %1866 = vmatmul.bf16.gmra.mxu0 %v1327
      %v1867 = vpop.f32.mrf.mxu0
      %v1868 = vadd.f32 %v1819, %v1867
      %v1869 = vpop.f32.mrf.mxu0
      %v1870 = vadd.f32 %v1821, %v1869
      %1871 = vmatmul.bf16.gmra.mxu0 %v1363
      %v1872 = vpop.f32.mrf.mxu0
      %v1873 = vadd.f32 %v1824, %v1872
      %v1874 = vpop.f32.mrf.mxu0
      %v1875 = vadd.f32 %v1826, %v1874
      %1876 = vmatmul.bf16.gmra.mxu0 %v1399
      %v1877 = vpop.f32.mrf.mxu0
      %v1878 = vadd.f32 %v1829, %v1877
      %v1879 = vpop.f32.mrf.mxu0
      %v1880 = vadd.f32 %v1831, %v1879
      %1881 = vmatmul.bf16.gmra.mxu0 %v1435
      %v1882 = vpop.f32.mrf.mxu0
      %v1883 = vadd.f32 %v1834, %v1882
      %v1884 = vpop.f32.mrf.mxu0
      %v1885 = vadd.f32 %v1836, %v1884
      %1886 = vmatmul.bf16.gmra.mxu0 %v1471
      %v1887 = vpop.f32.mrf.mxu0
      %v1888 = vadd.f32 %v1839, %v1887
      %v1889 = vpop.f32.mrf.mxu0
      %v1890 = vadd.f32 %v1841, %v1889
      %1891 = vmatmul.bf16.gmra.mxu0 %v1507
      %v1892 = vpop.f32.mrf.mxu0
      %v1893 = vadd.f32 %v1844, %v1892
      %v1894 = vpop.f32.mrf.mxu0
      %v1895 = vadd.f32 %v1846, %v1894
      %1896 = vmatmul.bf16.gmra.mxu0 %v1543
      %v1897 = vpop.f32.mrf.mxu0
      %v1898 = vadd.f32 %v1849, %v1897
      %v1899 = vpop.f32.mrf.mxu0
      %v1900 = vadd.f32 %v1851, %v1899
      %1901 = vmatmul.bf16.gmra.mxu0 %v1579
      %v1902 = vpop.f32.mrf.mxu0
      %v1903 = vadd.f32 %v1854, %v1902
      %v1904 = vpop.f32.mrf.mxu0
      %v1905 = vadd.f32 %v1856, %v1904
      %1906 = vdwg.mxu0
      %1907 = vmatpush.bf16.msra.mxu0 %v1784
      %1908 = vmatpush.bf16.msra.mxu0 %v1783
      %1909 = vmatpush.bf16.msra.mxu0 %v1782
      %1910 = vmatpush.bf16.msra.mxu0 %v1781
      %1911 = vmatpush.bf16.msra.mxu0 %v1780
      %1912 = vmatpush.bf16.msra.mxu0 %v1779
      %1913 = vmatpush.bf16.msra.mxu0 %v1778
      %1914 = vmatpush.bf16.msra.mxu0 %v1777
      %1915 = vmatmul.bf16.gmra.mxu0 %v1339
      %v1916 = vpop.f32.mrf.mxu0
      %v1917 = vadd.f32 %v1868, %v1916
      %v1918 = vpop.f32.mrf.mxu0
      %v1919 = vadd.f32 %v1870, %v1918
      %1920 = vmatmul.bf16.gmra.mxu0 %v1375
      %v1921 = vpop.f32.mrf.mxu0
      %v1922 = vadd.f32 %v1873, %v1921
      %v1923 = vpop.f32.mrf.mxu0
      %v1924 = vadd.f32 %v1875, %v1923
      %1925 = vmatmul.bf16.gmra.mxu0 %v1411
      %v1926 = vpop.f32.mrf.mxu0
      %v1927 = vadd.f32 %v1878, %v1926
      %v1928 = vpop.f32.mrf.mxu0
      %v1929 = vadd.f32 %v1880, %v1928
      %1930 = vmatmul.bf16.gmra.mxu0 %v1447
      %v1931 = vpop.f32.mrf.mxu0
      %v1932 = vadd.f32 %v1883, %v1931
      %v1933 = vpop.f32.mrf.mxu0
      %v1934 = vadd.f32 %v1885, %v1933
      %1935 = vmatmul.bf16.gmra.mxu0 %v1483
      %v1936 = vpop.f32.mrf.mxu0
      %v1937 = vadd.f32 %v1888, %v1936
      %v1938 = vpop.f32.mrf.mxu0
      %v1939 = vadd.f32 %v1890, %v1938
      %1940 = vmatmul.bf16.gmra.mxu0 %v1519
      %v1941 = vpop.f32.mrf.mxu0
      %v1942 = vadd.f32 %v1893, %v1941
      %v1943 = vpop.f32.mrf.mxu0
      %v1944 = vadd.f32 %v1895, %v1943
      %1945 = vmatmul.bf16.gmra.mxu0 %v1555
      %v1946 = vpop.f32.mrf.mxu0
      %v1947 = vadd.f32 %v1898, %v1946
      %v1948 = vpop.f32.mrf.mxu0
      %v1949 = vadd.f32 %v1900, %v1948
      %1950 = vmatmul.bf16.gmra.mxu0 %v1591
      %v1951 = vpop.f32.mrf.mxu0
      %v1952 = vadd.f32 %v1903, %v1951
      %v1953 = vpop.f32.mrf.mxu0
      %v1954 = vadd.f32 %v1905, %v1953
      %1955 = vdwg.mxu0
      %v2004 = vunpack.c.l.b16 %v1159
      %v2005 = vunpack.c.l.b16 %v1160
      %v2006 = vunpack.c.l.b16 %v1161
      %v2007 = vunpack.c.l.b16 %v1162
      %v2008 = vunpack.c.l.b16 %v1163
      %v2009 = vunpack.c.l.b16 %v1164
      %v2010 = vunpack.c.l.b16 %v1165
      %v2011 = vunpack.c.l.b16 %v1166
      %v2012 = vunpack.c.l.b16 %v1167
      %v2013 = vunpack.c.l.b16 %v1168
      %v2014 = vunpack.c.l.b16 %v1169
      %v2015 = vunpack.c.l.b16 %v1170
      %v2016 = vunpack.c.l.b16 %v1171
      %v2017 = vunpack.c.l.b16 %v1172
      %v2018 = vunpack.c.l.b16 %v1173
      %v2019 = vunpack.c.l.b16 %v1174
      %v2020 = vunpack.c.l.b16 %v1175
      %v2021 = vunpack.c.l.b16 %v1176
      %v2022 = vunpack.c.l.b16 %v1177
      %v2023 = vunpack.c.l.b16 %v1178
      %v2024 = vunpack.c.l.b16 %v1179
      %v2025 = vunpack.c.l.b16 %v1180
      %v2026 = vunpack.c.l.b16 %v1181
      %v2027 = vunpack.c.l.b16 %v1182
      %v2028 = vunpack.c.l.b16 %v1183
      %v2029 = vunpack.c.l.b16 %v1184
      %v2030 = vunpack.c.l.b16 %v1185
      %v2031 = vunpack.c.l.b16 %v1186
      %v2032 = vunpack.c.l.b16 %v1187
      %v2033 = vunpack.c.l.b16 %v1188
      %v2034 = vunpack.c.l.b16 %v1189
      %v2035 = vunpack.c.l.b16 %v1190
      %v2036 = vunpack.c.l.b16 %v1191
      %v2037 = vunpack.c.l.b16 %v1192
      %v2038 = vunpack.c.l.b16 %v1193
      %v2039 = vunpack.c.l.b16 %v1194
      %v2040 = vunpack.c.l.b16 %v1195
      %v2041 = vunpack.c.l.b16 %v1196
      %v2042 = vunpack.c.l.b16 %v1197
      %v2043 = vunpack.c.l.b16 %v1198
      %v2044 = vunpack.c.l.b16 %v1199
      %v2045 = vunpack.c.l.b16 %v1200
      %v2046 = vunpack.c.l.b16 %v1201
      %v2047 = vunpack.c.l.b16 %v1202
      %v2048 = vunpack.c.l.b16 %v1203
      %v2049 = vunpack.c.l.b16 %v1204
      %v2050 = vunpack.c.l.b16 %v1205
      %v2051 = vunpack.c.l.b16 %v1206
      %v2052 = vpack.c.b16 %v2005, %v2004
      %v2053 = vpack.c.b16 %v2007, %v2006
      %v2054 = vpack.c.b16 %v2009, %v2008
      %v2055 = vpack.c.b16 %v2011, %v2010
      %v2056 = vpack.c.b16 %v2013, %v2012
      %v2057 = vpack.c.b16 %v2015, %v2014
      %v2058 = vpack.c.b16 %v2017, %v2016
      %v2059 = vpack.c.b16 %v2019, %v2018
      %v2060 = vpack.c.b16 %v2021, %v2020
      %v2061 = vpack.c.b16 %v2023, %v2022
      %v2062 = vpack.c.b16 %v2025, %v2024
      %v2063 = vpack.c.b16 %v2027, %v2026
      %v2064 = vpack.c.b16 %v2029, %v2028
      %v2065 = vpack.c.b16 %v2031, %v2030
      %v2066 = vpack.c.b16 %v2033, %v2032
      %v2067 = vpack.c.b16 %v2035, %v2034
      %v2068 = vpack.c.b16 %v2037, %v2036
      %v2069 = vpack.c.b16 %v2039, %v2038
      %v2070 = vpack.c.b16 %v2041, %v2040
      %v2071 = vpack.c.b16 %v2043, %v2042
      %v2072 = vpack.c.b16 %v2045, %v2044
      %v2073 = vpack.c.b16 %v2047, %v2046
      %v2074 = vpack.c.b16 %v2049, %v2048
      %v2075 = vpack.c.b16 %v2051, %v2050
      %2100 = vmatpush.bf16.msra.mxu0 %v2059
      %2101 = vmatpush.bf16.msra.mxu0 %v2058
      %2102 = vmatpush.bf16.msra.mxu0 %v2057
      %2103 = vmatpush.bf16.msra.mxu0 %v2056
      %2104 = vmatpush.bf16.msra.mxu0 %v2055
      %2105 = vmatpush.bf16.msra.mxu0 %v2054
      %2106 = vmatpush.bf16.msra.mxu0 %v2053
      %2107 = vmatpush.bf16.msra.mxu0 %v2052
      %2108 = vmatmul.bf16.gmra.mxu0 %v1047
      %v2109 = vpop.f32.mrf.mxu0
      %v2110 = vadd.f32 %v1917, %v2109
      %v2111 = vpop.f32.mrf.mxu0
      %v2112 = vadd.f32 %v1919, %v2111
      %2113 = vmatmul.bf16.gmra.mxu0 %v1048
      %v2114 = vpop.f32.mrf.mxu0
      %v2115 = vadd.f32 %v1922, %v2114
      %v2116 = vpop.f32.mrf.mxu0
      %v2117 = vadd.f32 %v1924, %v2116
      %2118 = vmatmul.bf16.gmra.mxu0 %v1049
      %v2119 = vpop.f32.mrf.mxu0
      %v2120 = vadd.f32 %v1927, %v2119
      %v2121 = vpop.f32.mrf.mxu0
      %v2122 = vadd.f32 %v1929, %v2121
      %2123 = vmatmul.bf16.gmra.mxu0 %v1050
      %v2124 = vpop.f32.mrf.mxu0
      %v2125 = vadd.f32 %v1932, %v2124
      %v2126 = vpop.f32.mrf.mxu0
      %v2127 = vadd.f32 %v1934, %v2126
      %2128 = vmatmul.bf16.gmra.mxu0 %v1051
      %v2129 = vpop.f32.mrf.mxu0
      %v2130 = vadd.f32 %v1937, %v2129
      %v2131 = vpop.f32.mrf.mxu0
      %v2132 = vadd.f32 %v1939, %v2131
      %2133 = vmatmul.bf16.gmra.mxu0 %v1052
      %v2134 = vpop.f32.mrf.mxu0
      %v2135 = vadd.f32 %v1942, %v2134
      %v2136 = vpop.f32.mrf.mxu0
      %v2137 = vadd.f32 %v1944, %v2136
      %2138 = vmatmul.bf16.gmra.mxu0 %v1053
      %v2139 = vpop.f32.mrf.mxu0
      %v2140 = vadd.f32 %v1947, %v2139
      %v2141 = vpop.f32.mrf.mxu0
      %v2142 = vadd.f32 %v1949, %v2141
      %2143 = vmatmul.bf16.gmra.mxu0 %v1054
      %v2144 = vpop.f32.mrf.mxu0
      %v2145 = vadd.f32 %v1952, %v2144
      %v2146 = vpop.f32.mrf.mxu0
      %v2147 = vadd.f32 %v1954, %v2146
      %2148 = vdwg.mxu0
      %2149 = vmatpush.bf16.msra.mxu0 %v2067
      %2150 = vmatpush.bf16.msra.mxu0 %v2066
      %2151 = vmatpush.bf16.msra.mxu0 %v2065
      %2152 = vmatpush.bf16.msra.mxu0 %v2064
      %2153 = vmatpush.bf16.msra.mxu0 %v2063
      %2154 = vmatpush.bf16.msra.mxu0 %v2062
      %2155 = vmatpush.bf16.msra.mxu0 %v2061
      %2156 = vmatpush.bf16.msra.mxu0 %v2060
      %2157 = vmatmul.bf16.gmra.mxu0 %v1095
      %v2158 = vpop.f32.mrf.mxu0
      %v2159 = vadd.f32 %v2110, %v2158
      %v2160 = vpop.f32.mrf.mxu0
      %v2161 = vadd.f32 %v2112, %v2160
      %2162 = vmatmul.bf16.gmra.mxu0 %v1096
      %v2163 = vpop.f32.mrf.mxu0
      %v2164 = vadd.f32 %v2115, %v2163
      %v2165 = vpop.f32.mrf.mxu0
      %v2166 = vadd.f32 %v2117, %v2165
      %2167 = vmatmul.bf16.gmra.mxu0 %v1097
      %v2168 = vpop.f32.mrf.mxu0
      %v2169 = vadd.f32 %v2120, %v2168
      %v2170 = vpop.f32.mrf.mxu0
      %v2171 = vadd.f32 %v2122, %v2170
      %2172 = vmatmul.bf16.gmra.mxu0 %v1098
      %v2173 = vpop.f32.mrf.mxu0
      %v2174 = vadd.f32 %v2125, %v2173
      %v2175 = vpop.f32.mrf.mxu0
      %v2176 = vadd.f32 %v2127, %v2175
      %2177 = vmatmul.bf16.gmra.mxu0 %v1099
      %v2178 = vpop.f32.mrf.mxu0
      %v2179 = vadd.f32 %v2130, %v2178
      %v2180 = vpop.f32.mrf.mxu0
      %v2181 = vadd.f32 %v2132, %v2180
      %2182 = vmatmul.bf16.gmra.mxu0 %v1100
      %v2183 = vpop.f32.mrf.mxu0
      %v2184 = vadd.f32 %v2135, %v2183
      %v2185 = vpop.f32.mrf.mxu0
      %v2186 = vadd.f32 %v2137, %v2185
      %2187 = vmatmul.bf16.gmra.mxu0 %v1101
      %v2188 = vpop.f32.mrf.mxu0
      %v2189 = vadd.f32 %v2140, %v2188
      %v2190 = vpop.f32.mrf.mxu0
      %v2191 = vadd.f32 %v2142, %v2190
      %2192 = vmatmul.bf16.gmra.mxu0 %v1102
      %v2193 = vpop.f32.mrf.mxu0
      %v2194 = vadd.f32 %v2145, %v2193
      %v2195 = vpop.f32.mrf.mxu0
      %v2196 = vadd.f32 %v2147, %v2195
      %2197 = vdwg.mxu0
      %2198 = vmatpush.bf16.msra.mxu0 %v2075
      %2199 = vmatpush.bf16.msra.mxu0 %v2074
      %2200 = vmatpush.bf16.msra.mxu0 %v2073
      %2201 = vmatpush.bf16.msra.mxu0 %v2072
      %2202 = vmatpush.bf16.msra.mxu0 %v2071
      %2203 = vmatpush.bf16.msra.mxu0 %v2070
      %2204 = vmatpush.bf16.msra.mxu0 %v2069
      %2205 = vmatpush.bf16.msra.mxu0 %v2068
      %2206 = vmatmul.bf16.gmra.mxu0 %v1143
      %v2207 = vpop.f32.mrf.mxu0
      %v2208 = vadd.f32 %v2159, %v2207
      %v2209 = vpop.f32.mrf.mxu0
      %v2210 = vadd.f32 %v2161, %v2209
      %2211 = vmatmul.bf16.gmra.mxu0 %v1144
      %v2212 = vpop.f32.mrf.mxu0
      %v2213 = vadd.f32 %v2164, %v2212
      %v2214 = vpop.f32.mrf.mxu0
      %v2215 = vadd.f32 %v2166, %v2214
      %2216 = vmatmul.bf16.gmra.mxu0 %v1145
      %v2217 = vpop.f32.mrf.mxu0
      %v2218 = vadd.f32 %v2169, %v2217
      %v2219 = vpop.f32.mrf.mxu0
      %v2220 = vadd.f32 %v2171, %v2219
      %2221 = vmatmul.bf16.gmra.mxu0 %v1146
      %v2222 = vpop.f32.mrf.mxu0
      %v2223 = vadd.f32 %v2174, %v2222
      %v2224 = vpop.f32.mrf.mxu0
      %v2225 = vadd.f32 %v2176, %v2224
      %2226 = vmatmul.bf16.gmra.mxu0 %v1147
      %v2227 = vpop.f32.mrf.mxu0
      %v2228 = vadd.f32 %v2179, %v2227
      %v2229 = vpop.f32.mrf.mxu0
      %v2230 = vadd.f32 %v2181, %v2229
      %2231 = vmatmul.bf16.gmra.mxu0 %v1148
      %v2232 = vpop.f32.mrf.mxu0
      %v2233 = vadd.f32 %v2184, %v2232
      %v2234 = vpop.f32.mrf.mxu0
      %v2235 = vadd.f32 %v2186, %v2234
      %2236 = vmatmul.bf16.gmra.mxu0 %v1149
      %v2237 = vpop.f32.mrf.mxu0
      %v2238 = vadd.f32 %v2189, %v2237
      %v2239 = vpop.f32.mrf.mxu0
      %v2240 = vadd.f32 %v2191, %v2239
      %2241 = vmatmul.bf16.gmra.mxu0 %v1150
      %v2242 = vpop.f32.mrf.mxu0
      %v2243 = vadd.f32 %v2194, %v2242
      %v2244 = vpop.f32.mrf.mxu0
      %v2245 = vadd.f32 %v2196, %v2244
      %2246 = vdwg.mxu0
      %v2247 = vld [vmem:[#allocation2] sm:$0xe]
      %v2248 = vld [vmem:[#allocation2 + $0xc] sm:$0xe]
      %v2249 = vld [vmem:[#allocation2 + $0x18] sm:$0xe]
      %v2250 = vld [vmem:[#allocation2 + $0x24] sm:$0xe]
      %v2251 = vld [vmem:[#allocation2 + $0x30] sm:$0xe]
      %v2252 = vld [vmem:[#allocation2 + $0x3c] sm:$0xe]
      %v2253 = vld [vmem:[#allocation2 + $0x48] sm:$0xe]
      %v2254 = vld [vmem:[#allocation2 + $0x54] sm:$0xe]
      %v2255 = vld [vmem:[%s981] sm:$0xe]
      %v2256 = vld [vmem:[%s981 + $0xc] sm:$0xe]
      %v2257 = vld [vmem:[%s981 + $0x18] sm:$0xe]
      %v2258 = vld [vmem:[%s981 + $0x24] sm:$0xe]
      %v2259 = vld [vmem:[%s981 + $0x30] sm:$0xe]
      %v2260 = vld [vmem:[%s981 + $0x3c] sm:$0xe]
      %v2261 = vld [vmem:[%s981 + $0x48] sm:$0xe]
      %v2262 = vld [vmem:[%s981 + $0x54] sm:$0xe]
      %v2263 = vld [vmem:[%s998] sm:$0xe]
      %v2264 = vld [vmem:[%s998 + $0xc] sm:$0xe]
      %v2265 = vld [vmem:[%s998 + $0x18] sm:$0xe]
      %v2266 = vld [vmem:[%s998 + $0x24] sm:$0xe]
      %v2267 = vld [vmem:[%s998 + $0x30] sm:$0xe]
      %v2268 = vld [vmem:[%s998 + $0x3c] sm:$0xe]
      %v2269 = vld [vmem:[%s998 + $0x48] sm:$0xe]
      %v2270 = vld [vmem:[%s998 + $0x54] sm:$0xe]
      %v2279 = vunpack.c.l.b16 %v2247
      %v2280 = vunpack.c.l.b16 %v2248
      %v2281 = vunpack.c.l.b16 %v2249
      %v2282 = vunpack.c.l.b16 %v2250
      %v2283 = vunpack.c.l.b16 %v2251
      %v2284 = vunpack.c.l.b16 %v2252
      %v2285 = vunpack.c.l.b16 %v2253
      %v2286 = vunpack.c.l.b16 %v2254
      %v2287 = vpack.c.b16 %v1032, %v2279
      %v2288 = vpack.c.b16 %v1034, %v2280
      %v2289 = vpack.c.b16 %v1036, %v2281
      %v2290 = vpack.c.b16 %v1038, %v2282
      %v2291 = vpack.c.b16 %v1040, %v2283
      %v2292 = vpack.c.b16 %v1042, %v2284
      %v2293 = vpack.c.b16 %v1044, %v2285
      %v2294 = vpack.c.b16 %v1046, %v2286
      %v2303 = vunpack.c.l.b16 %v2255
      %v2304 = vunpack.c.l.b16 %v2256
      %v2305 = vunpack.c.l.b16 %v2257
      %v2306 = vunpack.c.l.b16 %v2258
      %v2307 = vunpack.c.l.b16 %v2259
      %v2308 = vunpack.c.l.b16 %v2260
      %v2309 = vunpack.c.l.b16 %v2261
      %v2310 = vunpack.c.l.b16 %v2262
      %v2311 = vpack.c.b16 %v1080, %v2303
      %v2312 = vpack.c.b16 %v1082, %v2304
      %v2313 = vpack.c.b16 %v1084, %v2305
      %v2314 = vpack.c.b16 %v1086, %v2306
      %v2315 = vpack.c.b16 %v1088, %v2307
      %v2316 = vpack.c.b16 %v1090, %v2308
      %v2317 = vpack.c.b16 %v1092, %v2309
      %v2318 = vpack.c.b16 %v1094, %v2310
      %v2327 = vunpack.c.l.b16 %v2263
      %v2328 = vunpack.c.l.b16 %v2264
      %v2329 = vunpack.c.l.b16 %v2265
      %v2330 = vunpack.c.l.b16 %v2266
      %v2331 = vunpack.c.l.b16 %v2267
      %v2332 = vunpack.c.l.b16 %v2268
      %v2333 = vunpack.c.l.b16 %v2269
      %v2334 = vunpack.c.l.b16 %v2270
      %v2335 = vpack.c.b16 %v1128, %v2327
      %v2336 = vpack.c.b16 %v1130, %v2328
      %v2337 = vpack.c.b16 %v1132, %v2329
      %v2338 = vpack.c.b16 %v1134, %v2330
      %v2339 = vpack.c.b16 %v1136, %v2331
      %v2340 = vpack.c.b16 %v1138, %v2332
      %v2341 = vpack.c.b16 %v1140, %v2333
      %v2342 = vpack.c.b16 %v1142, %v2334
      %vm2343 = vcmask 1046528
      %v2344 = vrot.slane %v2287, 1
      %v2345 = vrot.slane %v1247, 1
      %v2346 = vsel %vm2343, %v2344, %v2345
      %v2347 = vrot.slane %v2311, 1
      %v2348 = vrot.slane %v1271, 1
      %v2349 = vsel %vm2343, %v2347, %v2348
      %v2350 = vrot.slane %v2335, 1
      %v2351 = vrot.slane %v1295, 1
      %v2352 = vsel %vm2343, %v2350, %v2351
      %v2353 = vrot.slane %v2288, 1
      %v2354 = vrot.slane %v1248, 1
      %v2355 = vsel %vm2343, %v2353, %v2354
      %v2356 = vrot.slane %v2312, 1
      %v2357 = vrot.slane %v1272, 1
      %v2358 = vsel %vm2343, %v2356, %v2357
      %v2359 = vrot.slane %v2336, 1
      %v2360 = vrot.slane %v1296, 1
      %v2361 = vsel %vm2343, %v2359, %v2360
      %v2362 = vrot.slane %v2289, 1
      %v2363 = vrot.slane %v1249, 1
      %v2364 = vsel %vm2343, %v2362, %v2363
      %v2365 = vrot.slane %v2313, 1
      %v2366 = vrot.slane %v1273, 1
      %v2367 = vsel %vm2343, %v2365, %v2366
      %v2368 = vrot.slane %v2337, 1
      %v2369 = vrot.slane %v1297, 1
      %v2370 = vsel %vm2343, %v2368, %v2369
      %v2371 = vrot.slane %v2290, 1
      %v2372 = vrot.slane %v1250, 1
      %v2373 = vsel %vm2343, %v2371, %v2372
      %v2374 = vrot.slane %v2314, 1
      %v2375 = vrot.slane %v1274, 1
      %v2376 = vsel %vm2343, %v2374, %v2375
      %v2377 = vrot.slane %v2338, 1
      %v2378 = vrot.slane %v1298, 1
      %v2379 = vsel %vm2343, %v2377, %v2378
      %v2380 = vrot.slane %v2291, 1
      %v2381 = vrot.slane %v1251, 1
      %v2382 = vsel %vm2343, %v2380, %v2381
      %v2383 = vrot.slane %v2315, 1
      %v2384 = vrot.slane %v1275, 1
      %v2385 = vsel %vm2343, %v2383, %v2384
      %v2386 = vrot.slane %v2339, 1
      %v2387 = vrot.slane %v1299, 1
      %v2388 = vsel %vm2343, %v2386, %v2387
      %v2389 = vrot.slane %v2292, 1
      %v2390 = vrot.slane %v1252, 1
      %v2391 = vsel %vm2343, %v2389, %v2390
      %v2392 = vrot.slane %v2316, 1
      %v2393 = vrot.slane %v1276, 1
      %v2394 = vsel %vm2343, %v2392, %v2393
      %v2395 = vrot.slane %v2340, 1
      %v2396 = vrot.slane %v1300, 1
      %v2397 = vsel %vm2343, %v2395, %v2396
      %v2398 = vrot.slane %v2293, 1
      %v2399 = vrot.slane %v1253, 1
      %v2400 = vsel %vm2343, %v2398, %v2399
      %v2401 = vrot.slane %v2317, 1
      %v2402 = vrot.slane %v1277, 1
      %v2403 = vsel %vm2343, %v2401, %v2402
      %v2404 = vrot.slane %v2341, 1
      %v2405 = vrot.slane %v1301, 1
      %v2406 = vsel %vm2343, %v2404, %v2405
      %v2407 = vrot.slane %v2294, 1
      %v2408 = vrot.slane %v1254, 1
      %v2409 = vsel %vm2343, %v2407, %v2408
      %v2410 = vrot.slane %v2318, 1
      %v2411 = vrot.slane %v1278, 1
      %v2412 = vsel %vm2343, %v2410, %v2411
      %v2413 = vrot.slane %v2342, 1
      %v2414 = vrot.slane %v1302, 1
      %v2415 = vsel %vm2343, %v2413, %v2414
      %s2440 = scalar_lea.vmem %s4, 384
      %v2441 = vld [vmem:[%s2440] sm:$0xf]
      %v2442 = vld [vmem:[%s2440 + $0x4] sm:$0xf]
      %v2443 = vld [vmem:[%s2440 + $0x8] sm:$0xf]
      %v2444 = vld [vmem:[%s2440 + $0xc] sm:$0xf]
      %v2445 = vld [vmem:[%s2440 + $0x10] sm:$0xf]
      %v2446 = vld [vmem:[%s2440 + $0x14] sm:$0xf]
      %v2447 = vld [vmem:[%s2440 + $0x18] sm:$0xf]
      %v2448 = vld [vmem:[%s2440 + $0x1c] sm:$0xf]
      %v2449 = vld [vmem:[%s2440 + $0x20] sm:$0xf]
      %v2450 = vld [vmem:[%s2440 + $0x24] sm:$0xf]
      %v2451 = vld [vmem:[%s2440 + $0x28] sm:$0xf]
      %v2452 = vld [vmem:[%s2440 + $0x2c] sm:$0xf]
      %v2453 = vld [vmem:[%s2440 + $0x30] sm:$0xf]
      %v2454 = vld [vmem:[%s2440 + $0x34] sm:$0xf]
      %v2455 = vld [vmem:[%s2440 + $0x38] sm:$0xf]
      %v2456 = vld [vmem:[%s2440 + $0x3c] sm:$0xf]
      %v2457 = vld [vmem:[%s2440 + $0x40] sm:$0xf]
      %v2458 = vld [vmem:[%s2440 + $0x44] sm:$0xf]
      %v2459 = vld [vmem:[%s2440 + $0x48] sm:$0xf]
      %v2460 = vld [vmem:[%s2440 + $0x4c] sm:$0xf]
      %v2461 = vld [vmem:[%s2440 + $0x50] sm:$0xf]
      %v2462 = vld [vmem:[%s2440 + $0x54] sm:$0xf]
      %v2463 = vld [vmem:[%s2440 + $0x58] sm:$0xf]
      %v2464 = vld [vmem:[%s2440 + $0x5c] sm:$0xf]
      %v2465 = vld [vmem:[%s2440 + $0x60] sm:$0xf]
      %v2466 = vld [vmem:[%s2440 + $0x64] sm:$0xf]
      %v2467 = vld [vmem:[%s2440 + $0x68] sm:$0xf]
      %v2468 = vld [vmem:[%s2440 + $0x6c] sm:$0xf]
      %v2469 = vld [vmem:[%s2440 + $0x70] sm:$0xf]
      %v2470 = vld [vmem:[%s2440 + $0x74] sm:$0xf]
      %v2471 = vld [vmem:[%s2440 + $0x78] sm:$0xf]
      %v2472 = vld [vmem:[%s2440 + $0x7c] sm:$0xf]
      %v2473 = vld [vmem:[%s2440 + $0x80] sm:$0xf]
      %v2474 = vld [vmem:[%s2440 + $0x84] sm:$0xf]
      %v2475 = vld [vmem:[%s2440 + $0x88] sm:$0xf]
      %v2476 = vld [vmem:[%s2440 + $0x8c] sm:$0xf]
      %v2477 = vld [vmem:[%s2440 + $0x90] sm:$0xf]
      %v2478 = vld [vmem:[%s2440 + $0x94] sm:$0xf]
      %v2479 = vld [vmem:[%s2440 + $0x98] sm:$0xf]
      %v2480 = vld [vmem:[%s2440 + $0x9c] sm:$0xf]
      %v2481 = vld [vmem:[%s2440 + $0xa0] sm:$0xf]
      %v2482 = vld [vmem:[%s2440 + $0xa4] sm:$0xf]
      %v2483 = vld [vmem:[%s2440 + $0xa8] sm:$0xf]
      %v2484 = vld [vmem:[%s2440 + $0xac] sm:$0xf]
      %v2485 = vld [vmem:[%s2440 + $0xb0] sm:$0xf]
      %v2486 = vld [vmem:[%s2440 + $0xb4] sm:$0xf]
      %v2487 = vld [vmem:[%s2440 + $0xb8] sm:$0xf]
      %v2488 = vld [vmem:[%s2440 + $0xbc] sm:$0xf]
      %v2537 = vunpack.c.l.b16 %v2441
      %v2538 = vunpack.c.l.b16 %v2442
      %v2539 = vunpack.c.l.b16 %v2443
      %v2540 = vunpack.c.l.b16 %v2444
      %v2541 = vunpack.c.l.b16 %v2445
      %v2542 = vunpack.c.l.b16 %v2446
      %v2543 = vunpack.c.l.b16 %v2447
      %v2544 = vunpack.c.l.b16 %v2448
      %v2545 = vunpack.c.l.b16 %v2449
      %v2546 = vunpack.c.l.b16 %v2450
      %v2547 = vunpack.c.l.b16 %v2451
      %v2548 = vunpack.c.l.b16 %v2452
      %v2549 = vunpack.c.l.b16 %v2453
      %v2550 = vunpack.c.l.b16 %v2454
      %v2551 = vunpack.c.l.b16 %v2455
      %v2552 = vunpack.c.l.b16 %v2456
      %v2553 = vunpack.c.l.b16 %v2457
      %v2554 = vunpack.c.l.b16 %v2458
      %v2555 = vunpack.c.l.b16 %v2459
      %v2556 = vunpack.c.l.b16 %v2460
      %v2557 = vunpack.c.l.b16 %v2461
      %v2558 = vunpack.c.l.b16 %v2462
      %v2559 = vunpack.c.l.b16 %v2463
      %v2560 = vunpack.c.l.b16 %v2464
      %v2561 = vunpack.c.l.b16 %v2465
      %v2562 = vunpack.c.l.b16 %v2466
      %v2563 = vunpack.c.l.b16 %v2467
      %v2564 = vunpack.c.l.b16 %v2468
      %v2565 = vunpack.c.l.b16 %v2469
      %v2566 = vunpack.c.l.b16 %v2470
      %v2567 = vunpack.c.l.b16 %v2471
      %v2568 = vunpack.c.l.b16 %v2472
      %v2569 = vunpack.c.l.b16 %v2473
      %v2570 = vunpack.c.l.b16 %v2474
      %v2571 = vunpack.c.l.b16 %v2475
      %v2572 = vunpack.c.l.b16 %v2476
      %v2573 = vunpack.c.l.b16 %v2477
      %v2574 = vunpack.c.l.b16 %v2478
      %v2575 = vunpack.c.l.b16 %v2479
      %v2576 = vunpack.c.l.b16 %v2480
      %v2577 = vunpack.c.l.b16 %v2481
      %v2578 = vunpack.c.l.b16 %v2482
      %v2579 = vunpack.c.l.b16 %v2483
      %v2580 = vunpack.c.l.b16 %v2484
      %v2581 = vunpack.c.l.b16 %v2485
      %v2582 = vunpack.c.l.b16 %v2486
      %v2583 = vunpack.c.l.b16 %v2487
      %v2584 = vunpack.c.l.b16 %v2488
      %v2585 = vpack.c.b16 %v2538, %v2537
      %v2586 = vpack.c.b16 %v2540, %v2539
      %v2587 = vpack.c.b16 %v2542, %v2541
      %v2588 = vpack.c.b16 %v2544, %v2543
      %v2589 = vpack.c.b16 %v2546, %v2545
      %v2590 = vpack.c.b16 %v2548, %v2547
      %v2591 = vpack.c.b16 %v2550, %v2549
      %v2592 = vpack.c.b16 %v2552, %v2551
      %v2593 = vpack.c.b16 %v2554, %v2553
      %v2594 = vpack.c.b16 %v2556, %v2555
      %v2595 = vpack.c.b16 %v2558, %v2557
      %v2596 = vpack.c.b16 %v2560, %v2559
      %v2597 = vpack.c.b16 %v2562, %v2561
      %v2598 = vpack.c.b16 %v2564, %v2563
      %v2599 = vpack.c.b16 %v2566, %v2565
      %v2600 = vpack.c.b16 %v2568, %v2567
      %v2601 = vpack.c.b16 %v2570, %v2569
      %v2602 = vpack.c.b16 %v2572, %v2571
      %v2603 = vpack.c.b16 %v2574, %v2573
      %v2604 = vpack.c.b16 %v2576, %v2575
      %v2605 = vpack.c.b16 %v2578, %v2577
      %v2606 = vpack.c.b16 %v2580, %v2579
      %v2607 = vpack.c.b16 %v2582, %v2581
      %v2608 = vpack.c.b16 %v2584, %v2583
      %2633 = vmatpush.bf16.msra.mxu0 %v2592
      %2634 = vmatpush.bf16.msra.mxu0 %v2591
      %2635 = vmatpush.bf16.msra.mxu0 %v2590
      %2636 = vmatpush.bf16.msra.mxu0 %v2589
      %2637 = vmatpush.bf16.msra.mxu0 %v2588
      %2638 = vmatpush.bf16.msra.mxu0 %v2587
      %2639 = vmatpush.bf16.msra.mxu0 %v2586
      %2640 = vmatpush.bf16.msra.mxu0 %v2585
      %2641 = vmatmul.bf16.gmra.mxu0 %v2346
      %v2642 = vpop.f32.mrf.mxu0
      %v2643 = vadd.f32 0.0, %v2642
      %v2644 = vpop.f32.mrf.mxu0
      %v2645 = vadd.f32 0.0, %v2644
      %2646 = vmatmul.bf16.gmra.mxu0 %v2355
      %v2647 = vpop.f32.mrf.mxu0
      %v2648 = vadd.f32 0.0, %v2647
      %v2649 = vpop.f32.mrf.mxu0
      %v2650 = vadd.f32 0.0, %v2649
      %2651 = vmatmul.bf16.gmra.mxu0 %v2364
      %v2652 = vpop.f32.mrf.mxu0
      %v2653 = vadd.f32 0.0, %v2652
      %v2654 = vpop.f32.mrf.mxu0
      %v2655 = vadd.f32 0.0, %v2654
      %2656 = vmatmul.bf16.gmra.mxu0 %v2373
      %v2657 = vpop.f32.mrf.mxu0
      %v2658 = vadd.f32 0.0, %v2657
      %v2659 = vpop.f32.mrf.mxu0
      %v2660 = vadd.f32 0.0, %v2659
      %2661 = vmatmul.bf16.gmra.mxu0 %v2382
      %v2662 = vpop.f32.mrf.mxu0
      %v2663 = vadd.f32 0.0, %v2662
      %v2664 = vpop.f32.mrf.mxu0
      %v2665 = vadd.f32 0.0, %v2664
      %2666 = vmatmul.bf16.gmra.mxu0 %v2391
      %v2667 = vpop.f32.mrf.mxu0
      %v2668 = vadd.f32 0.0, %v2667
      %v2669 = vpop.f32.mrf.mxu0
      %v2670 = vadd.f32 0.0, %v2669
      %2671 = vmatmul.bf16.gmra.mxu0 %v2400
      %v2672 = vpop.f32.mrf.mxu0
      %v2673 = vadd.f32 0.0, %v2672
      %v2674 = vpop.f32.mrf.mxu0
      %v2675 = vadd.f32 0.0, %v2674
      %2676 = vmatmul.bf16.gmra.mxu0 %v2409
      %v2677 = vpop.f32.mrf.mxu0
      %v2678 = vadd.f32 0.0, %v2677
      %v2679 = vpop.f32.mrf.mxu0
      %v2680 = vadd.f32 0.0, %v2679
      %2681 = vdwg.mxu0
      %2682 = vmatpush.bf16.msra.mxu0 %v2600
      %2683 = vmatpush.bf16.msra.mxu0 %v2599
      %2684 = vmatpush.bf16.msra.mxu0 %v2598
      %2685 = vmatpush.bf16.msra.mxu0 %v2597
      %2686 = vmatpush.bf16.msra.mxu0 %v2596
      %2687 = vmatpush.bf16.msra.mxu0 %v2595
      %2688 = vmatpush.bf16.msra.mxu0 %v2594
      %2689 = vmatpush.bf16.msra.mxu0 %v2593
      %2690 = vmatmul.bf16.gmra.mxu0 %v2349
      %v2691 = vpop.f32.mrf.mxu0
      %v2692 = vadd.f32 %v2643, %v2691
      %v2693 = vpop.f32.mrf.mxu0
      %v2694 = vadd.f32 %v2645, %v2693
      %2695 = vmatmul.bf16.gmra.mxu0 %v2358
      %v2696 = vpop.f32.mrf.mxu0
      %v2697 = vadd.f32 %v2648, %v2696
      %v2698 = vpop.f32.mrf.mxu0
      %v2699 = vadd.f32 %v2650, %v2698
      %2700 = vmatmul.bf16.gmra.mxu0 %v2367
      %v2701 = vpop.f32.mrf.mxu0
      %v2702 = vadd.f32 %v2653, %v2701
      %v2703 = vpop.f32.mrf.mxu0
      %v2704 = vadd.f32 %v2655, %v2703
      %2705 = vmatmul.bf16.gmra.mxu0 %v2376
      %v2706 = vpop.f32.mrf.mxu0
      %v2707 = vadd.f32 %v2658, %v2706
      %v2708 = vpop.f32.mrf.mxu0
      %v2709 = vadd.f32 %v2660, %v2708
      %2710 = vmatmul.bf16.gmra.mxu0 %v2385
      %v2711 = vpop.f32.mrf.mxu0
      %v2712 = vadd.f32 %v2663, %v2711
      %v2713 = vpop.f32.mrf.mxu0
      %v2714 = vadd.f32 %v2665, %v2713
      %2715 = vmatmul.bf16.gmra.mxu0 %v2394
      %v2716 = vpop.f32.mrf.mxu0
      %v2717 = vadd.f32 %v2668, %v2716
      %v2718 = vpop.f32.mrf.mxu0
      %v2719 = vadd.f32 %v2670, %v2718
      %2720 = vmatmul.bf16.gmra.mxu0 %v2403
      %v2721 = vpop.f32.mrf.mxu0
      %v2722 = vadd.f32 %v2673, %v2721
      %v2723 = vpop.f32.mrf.mxu0
      %v2724 = vadd.f32 %v2675, %v2723
      %2725 = vmatmul.bf16.gmra.mxu0 %v2412
      %v2726 = vpop.f32.mrf.mxu0
      %v2727 = vadd.f32 %v2678, %v2726
      %v2728 = vpop.f32.mrf.mxu0
      %v2729 = vadd.f32 %v2680, %v2728
      %2730 = vdwg.mxu0
      %2731 = vmatpush.bf16.msra.mxu0 %v2608
      %2732 = vmatpush.bf16.msra.mxu0 %v2607
      %2733 = vmatpush.bf16.msra.mxu0 %v2606
      %2734 = vmatpush.bf16.msra.mxu0 %v2605
      %2735 = vmatpush.bf16.msra.mxu0 %v2604
      %2736 = vmatpush.bf16.msra.mxu0 %v2603
      %2737 = vmatpush.bf16.msra.mxu0 %v2602
      %2738 = vmatpush.bf16.msra.mxu0 %v2601
      %2739 = vmatmul.bf16.gmra.mxu0 %v2352
      %v2740 = vpop.f32.mrf.mxu0
      %v2741 = vadd.f32 %v2692, %v2740
      %v2742 = vpop.f32.mrf.mxu0
      %v2743 = vadd.f32 %v2694, %v2742
      %2744 = vmatmul.bf16.gmra.mxu0 %v2361
      %v2745 = vpop.f32.mrf.mxu0
      %v2746 = vadd.f32 %v2697, %v2745
      %v2747 = vpop.f32.mrf.mxu0
      %v2748 = vadd.f32 %v2699, %v2747
      %2749 = vmatmul.bf16.gmra.mxu0 %v2370
      %v2750 = vpop.f32.mrf.mxu0
      %v2751 = vadd.f32 %v2702, %v2750
      %v2752 = vpop.f32.mrf.mxu0
      %v2753 = vadd.f32 %v2704, %v2752
      %2754 = vmatmul.bf16.gmra.mxu0 %v2379
      %v2755 = vpop.f32.mrf.mxu0
      %v2756 = vadd.f32 %v2707, %v2755
      %v2757 = vpop.f32.mrf.mxu0
      %v2758 = vadd.f32 %v2709, %v2757
      %2759 = vmatmul.bf16.gmra.mxu0 %v2388
      %v2760 = vpop.f32.mrf.mxu0
      %v2761 = vadd.f32 %v2712, %v2760
      %v2762 = vpop.f32.mrf.mxu0
      %v2763 = vadd.f32 %v2714, %v2762
      %2764 = vmatmul.bf16.gmra.mxu0 %v2397
      %v2765 = vpop.f32.mrf.mxu0
      %v2766 = vadd.f32 %v2717, %v2765
      %v2767 = vpop.f32.mrf.mxu0
      %v2768 = vadd.f32 %v2719, %v2767
      %2769 = vmatmul.bf16.gmra.mxu0 %v2406
      %v2770 = vpop.f32.mrf.mxu0
      %v2771 = vadd.f32 %v2722, %v2770
      %v2772 = vpop.f32.mrf.mxu0
      %v2773 = vadd.f32 %v2724, %v2772
      %2774 = vmatmul.bf16.gmra.mxu0 %v2415
      %v2775 = vpop.f32.mrf.mxu0
      %v2776 = vadd.f32 %v2727, %v2775
      %v2777 = vpop.f32.mrf.mxu0
      %v2778 = vadd.f32 %v2729, %v2777
      %2779 = vdwg.mxu0
      %v2780 = vadd.f32 %v2208, %v2741
      %v2781 = vadd.f32 %v2210, %v2743
      %v2782 = vadd.f32 %v2213, %v2746
      %v2783 = vadd.f32 %v2215, %v2748
      %v2784 = vadd.f32 %v2218, %v2751
      %v2785 = vadd.f32 %v2220, %v2753
      %v2786 = vadd.f32 %v2223, %v2756
      %v2787 = vadd.f32 %v2225, %v2758
      %v2788 = vadd.f32 %v2228, %v2761
      %v2789 = vadd.f32 %v2230, %v2763
      %v2790 = vadd.f32 %v2233, %v2766
      %v2791 = vadd.f32 %v2235, %v2768
      %v2792 = vadd.f32 %v2238, %v2771
      %v2793 = vadd.f32 %v2240, %v2773
      %v2794 = vadd.f32 %v2243, %v2776
      %v2795 = vadd.f32 %v2245, %v2778
      %v2796 = vld [vmem:[%s5] sm:$0x1]
      %v2798 = vperm.slane %v2796, 0
      %v2800 = vadd.f32 %v2780, %v2798
      %v2801 = vadd.f32 %v2781, %v2798
      %v2802 = vadd.f32 %v2782, %v2798
      %v2803 = vadd.f32 %v2783, %v2798
      %v2804 = vadd.f32 %v2784, %v2798
      %v2805 = vadd.f32 %v2785, %v2798
      %v2806 = vadd.f32 %v2786, %v2798
      %v2807 = vadd.f32 %v2787, %v2798
      %v2808 = vadd.f32 %v2788, %v2798
      %v2809 = vadd.f32 %v2789, %v2798
      %v2810 = vadd.f32 %v2790, %v2798
      %v2811 = vadd.f32 %v2791, %v2798
      %v2812 = vadd.f32 %v2792, %v2798
      %v2813 = vadd.f32 %v2793, %v2798
      %v2814 = vadd.f32 %v2794, %v2798
      %v2815 = vadd.f32 %v2795, %v2798
      %vm2816 = vcmp.ge.f32.partialorder %v2800, 0.0
      %vm2817 = vcmp.ge.f32.partialorder %v2801, 0.0
      %vm2818 = vcmp.ge.f32.partialorder %v2802, 0.0
      %vm2819 = vcmp.ge.f32.partialorder %v2803, 0.0
      %vm2820 = vcmp.ge.f32.partialorder %v2804, 0.0
      %vm2821 = vcmp.ge.f32.partialorder %v2805, 0.0
      %vm2822 = vcmp.ge.f32.partialorder %v2806, 0.0
      %vm2823 = vcmp.ge.f32.partialorder %v2807, 0.0
      %vm2824 = vcmp.ge.f32.partialorder %v2808, 0.0
      %vm2825 = vcmp.ge.f32.partialorder %v2809, 0.0
      %vm2826 = vcmp.ge.f32.partialorder %v2810, 0.0
      %vm2827 = vcmp.ge.f32.partialorder %v2811, 0.0
      %vm2828 = vcmp.ge.f32.partialorder %v2812, 0.0
      %vm2829 = vcmp.ge.f32.partialorder %v2813, 0.0
      %vm2830 = vcmp.ge.f32.partialorder %v2814, 0.0
      %vm2831 = vcmp.ge.f32.partialorder %v2815, 0.0
      %v2832 = vmul.f32 %v2800, 0.1
      %v2833 = vmul.f32 %v2801, 0.1
      %v2834 = vmul.f32 %v2802, 0.1
      %v2835 = vmul.f32 %v2803, 0.1
      %v2836 = vmul.f32 %v2804, 0.1
      %v2837 = vmul.f32 %v2805, 0.1
      %v2838 = vmul.f32 %v2806, 0.1
      %v2839 = vmul.f32 %v2807, 0.1
      %v2840 = vmul.f32 %v2808, 0.1
      %v2841 = vmul.f32 %v2809, 0.1
      %v2842 = vmul.f32 %v2810, 0.1
      %v2843 = vmul.f32 %v2811, 0.1
      %v2844 = vmul.f32 %v2812, 0.1
      %v2845 = vmul.f32 %v2813, 0.1
      %v2846 = vmul.f32 %v2814, 0.1
      %v2847 = vmul.f32 %v2815, 0.1
      %v2848 = vsel %vm2816, %v2800, %v2832
      %v2849 = vsel %vm2817, %v2801, %v2833
      %v2850 = vsel %vm2818, %v2802, %v2834
      %v2851 = vsel %vm2819, %v2803, %v2835
      %v2852 = vsel %vm2820, %v2804, %v2836
      %v2853 = vsel %vm2821, %v2805, %v2837
      %v2854 = vsel %vm2822, %v2806, %v2838
      %v2855 = vsel %vm2823, %v2807, %v2839
      %v2856 = vsel %vm2824, %v2808, %v2840
      %v2857 = vsel %vm2825, %v2809, %v2841
      %v2858 = vsel %vm2826, %v2810, %v2842
      %v2859 = vsel %vm2827, %v2811, %v2843
      %v2860 = vsel %vm2828, %v2812, %v2844
      %v2861 = vsel %vm2829, %v2813, %v2845
      %v2862 = vsel %vm2830, %v2814, %v2846
      %v2863 = vsel %vm2831, %v2815, %v2847
      %v2864 = vpack.c.bf16 %v2848, %v2848
      %v2865 = vpack.c.bf16 %v2849, %v2849
      %v2866 = vpack.c.bf16 %v2850, %v2850
      %v2867 = vpack.c.bf16 %v2851, %v2851
      %v2868 = vpack.c.bf16 %v2852, %v2852
      %v2869 = vpack.c.bf16 %v2853, %v2853
      %v2870 = vpack.c.bf16 %v2854, %v2854
      %v2871 = vpack.c.bf16 %v2855, %v2855
      %v2872 = vpack.c.bf16 %v2856, %v2856
      %v2873 = vpack.c.bf16 %v2857, %v2857
      %v2874 = vpack.c.bf16 %v2858, %v2858
      %v2875 = vpack.c.bf16 %v2859, %v2859
      %v2876 = vpack.c.bf16 %v2860, %v2860
      %v2877 = vpack.c.bf16 %v2861, %v2861
      %v2878 = vpack.c.bf16 %v2862, %v2862
      %v2879 = vpack.c.bf16 %v2863, %v2863
      %2880 = vst [vmem:[%s340] sm:$0xf] %v2864
      %2881 = vst [vmem:[%s340 + $0x8] sm:$0xf] %v2865
      %2882 = vst [vmem:[%s340 + $0x20] sm:$0xf] %v2866
      %2883 = vst [vmem:[%s340 + $0x28] sm:$0xf] %v2867
      %2884 = vst [vmem:[%s340 + $0x40] sm:$0xf] %v2868
      %2885 = vst [vmem:[%s340 + $0x48] sm:$0xf] %v2869
      %2886 = vst [vmem:[%s340 + $0x60] sm:$0xf] %v2870
      %2887 = vst [vmem:[%s340 + $0x68] sm:$0xf] %v2871
      %2888 = vst [vmem:[%s340 + $0x80] sm:$0xf] %v2872
      %2889 = vst [vmem:[%s340 + $0x88] sm:$0xf] %v2873
      %2890 = vst [vmem:[%s340 + $0xa0] sm:$0xf] %v2874
      %2891 = vst [vmem:[%s340 + $0xa8] sm:$0xf] %v2875
      %2892 = vst [vmem:[%s340 + $0xc0] sm:$0xf] %v2876
      %2893 = vst [vmem:[%s340 + $0xc8] sm:$0xf] %v2877
      %2894 = vst [vmem:[%s340 + $0xe0] sm:$0xf] %v2878
      %2895 = vst [vmem:[%s340 + $0xe8] sm:$0xf] %v2879
      %2896 = vst [vmem:[%s340 + $0x4] sm:$0xf] %v2864
      %2897 = vst [vmem:[%s340 + $0xc] sm:$0xf] %v2865
      %2898 = vst [vmem:[%s340 + $0x24] sm:$0xf] %v2866
      %2899 = vst [vmem:[%s340 + $0x2c] sm:$0xf] %v2867
      %2900 = vst [vmem:[%s340 + $0x44] sm:$0xf] %v2868
      %2901 = vst [vmem:[%s340 + $0x4c] sm:$0xf] %v2869
      %2902 = vst [vmem:[%s340 + $0x64] sm:$0xf] %v2870
      %2903 = vst [vmem:[%s340 + $0x6c] sm:$0xf] %v2871
      %2904 = vst [vmem:[%s340 + $0x84] sm:$0xf] %v2872
      %2905 = vst [vmem:[%s340 + $0x8c] sm:$0xf] %v2873
      %2906 = vst [vmem:[%s340 + $0xa4] sm:$0xf] %v2874
      %2907 = vst [vmem:[%s340 + $0xac] sm:$0xf] %v2875
      %2908 = vst [vmem:[%s340 + $0xc4] sm:$0xf] %v2876
      %2909 = vst [vmem:[%s340 + $0xcc] sm:$0xf] %v2877
      %2910 = vst [vmem:[%s340 + $0xe4] sm:$0xf] %v2878
      %2911 = vst [vmem:[%s340 + $0xec] sm:$0xf] %v2879
      %s2912 = scalar_lea.vmem %s340, 16
      %2913 = vst [vmem:[%s2912] sm:$0xf] %v2864
      %2914 = vst [vmem:[%s2912 + $0x8] sm:$0xf] %v2865
      %2915 = vst [vmem:[%s2912 + $0x20] sm:$0xf] %v2866
      %2916 = vst [vmem:[%s2912 + $0x28] sm:$0xf] %v2867
      %2917 = vst [vmem:[%s2912 + $0x40] sm:$0xf] %v2868
      %2918 = vst [vmem:[%s2912 + $0x48] sm:$0xf] %v2869
      %2919 = vst [vmem:[%s2912 + $0x60] sm:$0xf] %v2870
      %2920 = vst [vmem:[%s2912 + $0x68] sm:$0xf] %v2871
      %2921 = vst [vmem:[%s2912 + $0x80] sm:$0xf] %v2872
      %2922 = vst [vmem:[%s2912 + $0x88] sm:$0xf] %v2873
      %2923 = vst [vmem:[%s2912 + $0xa0] sm:$0xf] %v2874
      %2924 = vst [vmem:[%s2912 + $0xa8] sm:$0xf] %v2875
      %2925 = vst [vmem:[%s2912 + $0xc0] sm:$0xf] %v2876
      %2926 = vst [vmem:[%s2912 + $0xc8] sm:$0xf] %v2877
      %2927 = vst [vmem:[%s2912 + $0xe0] sm:$0xf] %v2878
      %2928 = vst [vmem:[%s2912 + $0xe8] sm:$0xf] %v2879
      %2929 = vst [vmem:[%s2912 + $0x4] sm:$0xf] %v2864
      %2930 = vst [vmem:[%s2912 + $0xc] sm:$0xf] %v2865
      %2931 = vst [vmem:[%s2912 + $0x24] sm:$0xf] %v2866
      %2932 = vst [vmem:[%s2912 + $0x2c] sm:$0xf] %v2867
      %2933 = vst [vmem:[%s2912 + $0x44] sm:$0xf] %v2868
      %2934 = vst [vmem:[%s2912 + $0x4c] sm:$0xf] %v2869
      %2935 = vst [vmem:[%s2912 + $0x64] sm:$0xf] %v2870
      %2936 = vst [vmem:[%s2912 + $0x6c] sm:$0xf] %v2871
      %2937 = vst [vmem:[%s2912 + $0x84] sm:$0xf] %v2872
      %2938 = vst [vmem:[%s2912 + $0x8c] sm:$0xf] %v2873
      %2939 = vst [vmem:[%s2912 + $0xa4] sm:$0xf] %v2874
      %2940 = vst [vmem:[%s2912 + $0xac] sm:$0xf] %v2875
      %2941 = vst [vmem:[%s2912 + $0xc4] sm:$0xf] %v2876
      %2942 = vst [vmem:[%s2912 + $0xcc] sm:$0xf] %v2877
      %2943 = vst [vmem:[%s2912 + $0xe4] sm:$0xf] %v2878
      %2944 = vst [vmem:[%s2912 + $0xec] sm:$0xf] %v2879
      %s2945 = smul.u32 8, %s22
      %p2946 = scmp.lt.s32.totalorder %s21, 1
      %s2947 = scalar_select %p2946, %s21, 1
      %p2948 = scmp.lt.s32.totalorder %s2945, 15
      %s2949 = scalar_select %p2948, %s2945, 15
      %s2950 = smul.addr %s2949, 8
      %s2951 = smul.addr %s2947, 128
      %s2952 = sadd.s32 %s2950, %s2951
      %s2953 = smul.addr %s2952, 4
      %s2954 = scalar_lea.vmem %s6, %s2953
      // Predicated region
      $region53: #{_lambda_.1} parent=43 // pred_check
        %p2955 = pneg %p191
      $region54: #{_lambda_.1} parent=43 // pred_check_branch
        %2957 = sbr.rel (%p2955) target = $region56
      $region55: #{_lambda_.1} parent=43 // pred_region
        %s2958 = smul.u32 8, %s22
      $region56: #{_lambda_.1} parent=43 // pred_fallthru
        _
    $region44: #{_lambda_.1} parent=5 // pred_fallthru
      _
    %p2959 = scmp.le.s32.totalorder 2, %s12
    // Predicated region
    $region57: #{_lambda_.1} parent=5 // pred_check
      %p2960 = pneg %p2959
    $region58: #{_lambda_.1} parent=5 // pred_check_branch
      %2962 = sbr.rel (%p2960) target = $region60
    $region59: #{_lambda_.1} parent=5 // pred_region
      %s2963 = ssub.s32 %s12, 2
      // Predicated region
      $region61: #{_lambda_.1} parent=59 // pred_check
        %p2964 = pneg %p197
      $region62: #{_lambda_.1} parent=59 // pred_check_branch
        %2966 = sbr.rel (%p2964) target = $region64
      $region63: #{_lambda_.1} parent=59 // pred_region
        %s2967 = smul.u32 8, %s24
        %p2968 = scmp.lt.s32.totalorder %s23, 1
        %s2969 = scalar_select %p2968, %s23, 1
        %p2970 = scmp.lt.s32.totalorder %s2967, 15
        %s2971 = scalar_select %p2970, %s2967, 15
        %s2972 = smul.addr %s2971, 8
        %s2973 = smul.addr %s2969, 128
        %s2974 = sadd.s32 %s2972, %s2973
        %s2975 = smul.addr %s2974, 4
        %s2976 = scalar_lea.vmem %s6, %s2975
      $region64: #{_lambda_.1} parent=59 // pred_fallthru
        _
    $region60: #{_lambda_.1} parent=5 // pred_fallthru
      _
  $region6: #{_lambda_.1} parent=0 // loop_footer
    %s16 = sadd.s32 1, %s12
  $region7: #{_lambda_.1} parent=0 // loop_footer_branch
    %11 = sbr.rel target = $region3
  $region8: #{_lambda_.1} parent=0 // loop_exit
    _

</llo_original>
